<compile_context>
chip_gen: v6e
topology: v6e:2x2x1
jax: 0.10.0
libtpu: 0.0.40
codegen_flags: <defaults>
</compile_context>

<pallas_src>
import functools

import jax
import jax.numpy as jnp
import numpy as np
from jax.experimental import pallas as pl
from jax.experimental.pallas import tpu as pltpu


# ------------------------------ fused kernel --------------------------------

def gcn_fused_kernel(
    num_classes,
    # scalar-prefetch refs (SMEM)
    src_ref, dst_ref,
    # node-phase inputs
    adj_hbm_ref, nfeat_ref, ns_ref, nd_ref,
    c1w_ref, c1b_ref, bn16s_ref, bn16b_ref, c2w_ref, c2b_ref,
    # edge-phase inputs
    ef_ref,
    we_ref, be_ref, w1e_ref, w1n_ref, b1_ref, bn32s_ref, bn32b_ref,
    w2_ref, b2_ref,
    # output
    o_ref,
    # scratch
    adj_vmem, adj_sem, x2_ref, hsrc_ref, hdst_ref,
):
    f32 = jnp.float32
    n = x2_ref.shape[0]
    te = ef_ref.shape[0]

    # --------- node phase: grid step 0 only; x2 stays resident in VMEM ------
    @pl.when(pl.program_id(0) == 0)
    def _node_phase():
        # adj lives in HBM (pl.ANY); copy it once into a single-buffered scratch.
        cp = pltpu.make_async_copy(adj_hbm_ref, adj_vmem, adj_sem)
        cp.start()
        cp.wait()
        adj = adj_vmem[...]                                        # (N, N) bf16

        # conv1: ReLU( nd * (A @ (ns * (X @ W1))) + b1 )
        h1 = jnp.dot(nfeat_ref[...], c1w_ref[...], preferred_element_type=f32)
        h1 = (h1 * ns_ref[...]).astype(jnp.bfloat16)               # (N, 16)
        x1 = jnp.dot(adj, h1, preferred_element_type=f32) * nd_ref[...] + c1b_ref[...]
        x1 = jnp.maximum(x1, 0.0)
        # Dropout (eval) = identity; BatchNorm1d(16) eval = per-feature affine.
        x1 = x1 * bn16s_ref[...] + bn16b_ref[...]

        # conv2: nd * (A @ (ns * (x1 @ W2))) + b2  -> kept resident for edge phase.
        h2 = jnp.dot(x1, c2w_ref[...], preferred_element_type=f32)
        h2 = (h2 * ns_ref[...]).astype(jnp.bfloat16)               # (N, 64)
        x2_ref[...] = (jnp.dot(adj, h2, preferred_element_type=f32) * nd_ref[...]
                       + c2b_ref[...])

    # --------- edge phase: one tile of edges per grid step -------------------
    ebase = pl.program_id(0) * te

    eh = jnp.dot(ef_ref[...], we_ref[...], preferred_element_type=f32) + be_ref[...]
    eh = jnp.maximum(eh, 0.0)                                      # (TE, 16)

    # Real gather: indices come from SMEM (scalar prefetch); copy rows of the
    # VMEM-resident x2 with dynamic sublane slices (no one-hot masks).
    def _gather(t, carry):
        si = jnp.clip(src_ref[ebase + t], 0, n - 1)
        di = jnp.clip(dst_ref[ebase + t], 0, n - 1)
        hsrc_ref[pl.ds(t, 1), :] = x2_ref[pl.ds(si, 1), :]
        hdst_ref[pl.ds(t, 1), :] = x2_ref[pl.ds(di, 1), :]
        return carry

    jax.lax.fori_loop(0, te, _gather, 0)

    # [x2[u], x2[v]] as one lane-aligned (TE, 128) operand -> single MXU pass.
    hn = jnp.concatenate([hsrc_ref[...], hdst_ref[...]], axis=1)   # (TE, 128)
    z = (jnp.dot(eh, w1e_ref[...], preferred_element_type=f32)
         + jnp.dot(hn, w1n_ref[...], preferred_element_type=f32)
         + b1_ref[...])
    z = jnp.maximum(z, 0.0)
    z = z * bn32s_ref[...] + bn32b_ref[...]                        # eval BatchNorm1d(32)

    # Classifier head padded to 128 lanes (lane-dense stores); padded columns
    # are zero weights/bias and are masked out of the log-softmax.
    logits = jnp.dot(z, w2_ref[...], preferred_element_type=f32) + b2_ref[...]
    logits = jnp.maximum(logits, 0.0)                              # (TE, 128)

    col = jax.lax.broadcasted_iota(jnp.int32, logits.shape, 1)
    valid = col < num_classes
    masked = jnp.where(valid, logits, -1e30)
    m = jnp.max(masked, axis=1, keepdims=True)
    p = jnp.where(valid, jnp.exp(logits - m), 0.0)
    lse = m + jnp.log(jnp.sum(p, axis=1, keepdims=True))
    o_ref[...] = logits - lse


# -------------------------------- wrapper ------------------------------------

def _resident_spec(arr):
    """Full-array block with a constant index_map (DMA'd once, stays resident)."""
    zeros = (0,) * arr.ndim
    return pl.BlockSpec(arr.shape, lambda i, *_: zeros)


def gcn_forward(params, adj, src, dst, n_feats, e_feats, *, edge_tile=512):
    f32 = jnp.float32
    n = adj.shape[0]
    e = e_feats.shape[0]
    c = params["w2"].shape[1]
    cpad = 128 * pl.cdiv(c, 128)
    # TODO(synk): tune edge_tile per generation (multiples of 256 on v6e/v7x,
    #             128 on v5e) and grow it once VMEM allows.
    te = min(edge_tile, e)
    grid = pl.cdiv(e, te)

    # Degree norms (DGL GraphConv norm='both', degrees clamped to >= 1),
    # computed once in f32 and passed as tiny (N,1) vectors.
    out_deg = jnp.maximum(jnp.sum(adj, axis=0), 1.0)               # per-src
    in_deg = jnp.maximum(jnp.sum(adj, axis=1), 1.0)                # per-dst
    ns = (out_deg ** -0.5).reshape(n, 1).astype(f32)
    nd = (in_deg ** -0.5).reshape(n, 1).astype(f32)

    adj_bf16 = adj.astype(jnp.bfloat16)                            # counts exact in bf16

    # Pad classifier head to 128 lanes for dense output stores.
    w2p = jnp.zeros((params["w2"].shape[0], cpad), f32).at[:, :c].set(params["w2"])
    b2p = jnp.zeros((1, cpad), f32).at[:, :c].set(params["b2"])

    # Pad src/dst so every edge tile reads valid SMEM entries.
    ep = grid * te
    src_p = jnp.zeros((ep,), jnp.int32).at[:e].set(src.astype(jnp.int32))
    dst_p = jnp.zeros((ep,), jnp.int32).at[:e].set(dst.astype(jnp.int32))

    node_resident = (n_feats.astype(f32), ns, nd,
                     params["conv1_w"], params["conv1_b"],
                     params["bn16_scale"], params["bn16_shift"],
                     params["conv2_w"], params["conv2_b"])
    edge_resident = (params["we"], params["be"],
                     params["w1e"], params["w1sd"], params["b1"],
                     params["bn32_scale"], params["bn32_shift"],
                     w2p, b2p)

    in_specs = ([pl.BlockSpec(memory_space=pl.ANY)]                # adj: raw HBM ref
                + [_resident_spec(a) for a in node_resident]
                + [pl.BlockSpec((te, e_feats.shape[1]), lambda i, *_: (i, 0))]
                + [_resident_spec(a) for a in edge_resident])

    grid_spec = pltpu.PrefetchScalarGridSpec(
        num_scalar_prefetch=2,                                     # src / dst indices
        grid=(grid,),
        in_specs=in_specs,
        out_specs=pl.BlockSpec((te, cpad), lambda i, *_: (i, 0)),
        scratch_shapes=[
            pltpu.VMEM((n, n), jnp.bfloat16),                      # adj (node phase)
            pltpu.SemaphoreType.DMA,                               # adj DMA completion
            pltpu.VMEM((n, 64), f32),                              # x2 (resident)
            pltpu.VMEM((te, 64), f32),                             # gathered src rows
            pltpu.VMEM((te, 64), f32),                             # gathered dst rows
        ],
    )

    kernel = functools.partial(gcn_fused_kernel, c)

    out = pl.pallas_call(
        kernel,
        out_shape=jax.ShapeDtypeStruct((grid * te, cpad), f32),
        grid_spec=grid_spec,
        compiler_params=pltpu.CompilerParams(
            # Node phase (step 0) writes the x2 scratch consumed by every edge
            # tile, so the edge axis must execute sequentially on one core.
            dimension_semantics=("arbitrary",),
            vmem_limit_bytes=48 * 1024 * 1024,
        ),
    )(src_p, dst_p, adj_bf16, *node_resident, e_feats.astype(f32), *edge_resident)

    return out[:e, :c]


# ---------------------------- plain-JAX reference ---------------------------

def gcn_reference(params, adj, src, dst, n_feats, e_feats):
    out_deg = jnp.maximum(adj.sum(axis=0), 1.0)
    in_deg = jnp.maximum(adj.sum(axis=1), 1.0)
    ns = (out_deg ** -0.5)[:, None]
    nd = (in_deg ** -0.5)[:, None]

    x = jnp.maximum(nd * (adj @ (ns * (n_feats @ params["conv1_w"])))
                    + params["conv1_b"], 0.0)
    x = x * params["bn16_scale"] + params["bn16_shift"]
    x = nd * (adj @ (ns * (x @ params["conv2_w"]))) + params["conv2_b"]

    eh = jnp.maximum(e_feats @ params["we"] + params["be"], 0.0)
    hn = jnp.concatenate([x[src], x[dst]], axis=1)
    z = jnp.maximum(eh @ params["w1e"] + hn @ params["w1sd"] + params["b1"], 0.0)
    z = z * params["bn32_scale"] + params["bn32_shift"]
    logits = jnp.maximum(z @ params["w2"] + params["b2"], 0.0)
    return logits - jax.scipy.special.logsumexp(logits, axis=1, keepdims=True)


# ------------------------------- param init ---------------------------------

def init_params(key, node_fs, edge_fs, num_classes):
    hidden = 16                     # EdgePredictor hidden_size
    ks = jax.random.split(key, 22)
    eps = 1e-5

    def bn(kg, kb, km, kv, nfeat):
        gamma = 1.0 + 0.1 * jax.random.normal(kg, (1, nfeat), jnp.float32)
        beta = 0.1 * jax.random.normal(kb, (1, nfeat), jnp.float32)
        mean = 0.1 * jax.random.normal(km, (1, nfeat), jnp.float32)
        var = 1.0 + 0.1 * jax.random.uniform(kv, (1, nfeat), jnp.float32)
        scale = gamma / jnp.sqrt(var + eps)
        shift = beta - mean * scale
        return scale, shift

    bn16_scale, bn16_shift = bn(ks[4], ks[5], ks[6], ks[7], 16)
    bn32_scale, bn32_shift = bn(ks[12], ks[13], ks[14], ks[15], 2 * hidden)

    # Linear(144 -> 32) weight, split as [edge(16) | src(64)+dst(64)].
    w_pred1 = 0.1 * jax.random.normal(ks[9], (hidden + 2 * 64, 2 * hidden), jnp.float32)
    return {
        # GraphConv(node_fs -> 16) and GraphConv(16 -> 64)
        "conv1_w": 0.1 * jax.random.normal(ks[0], (node_fs, 16), jnp.float32),
        "conv1_b": 0.1 * jax.random.normal(ks[1], (1, 16), jnp.float32),
        "conv2_w": 0.1 * jax.random.normal(ks[2], (16, 64), jnp.float32),
        "conv2_b": 0.1 * jax.random.normal(ks[3], (1, 64), jnp.float32),
        "bn16_scale": bn16_scale, "bn16_shift": bn16_shift,
        # EdgePredictor
        "we": 0.1 * jax.random.normal(ks[8], (edge_fs, hidden), jnp.float32),
        "be": 0.1 * jax.random.normal(ks[16], (1, hidden), jnp.float32),
        "w1e": w_pred1[:hidden],                 # (16, 32)
        "w1sd": w_pred1[hidden:],                # (128, 32)
        "b1": 0.1 * jax.random.normal(ks[10], (1, 2 * hidden), jnp.float32),
        "bn32_scale": bn32_scale, "bn32_shift": bn32_shift,
        "w2": 0.1 * jax.random.normal(ks[11], (2 * hidden, num_classes), jnp.float32),
        "b2": 0.1 * jax.random.normal(ks[17], (1, num_classes), jnp.float32),
    }


# --------------------------------- main --------------------------------------

if __name__ == "__main__":
    NODE_FS, EDGE_FS, NUM_CLASSES = 8, 4, 5
    N, E = 16, 32

    key = jax.random.PRNGKey(0)
    k_graph, k_nf, k_ef, k_params = jax.random.split(key, 4)
    k_src, k_dst = jax.random.split(k_graph)

    src = jax.random.randint(k_src, (E,), 0, N)
    dst = jax.random.randint(k_dst, (E,), 0, N)
    adj = jnp.zeros((N, N), jnp.float32).at[dst, src].add(1.0)     # (N_dst, N_src)

    n_feats = jax.random.normal(k_nf, (N, NODE_FS), jnp.float32)
    e_feats = jax.random.normal(k_ef, (E, EDGE_FS), jnp.float32)

    params = init_params(k_params, NODE_FS, EDGE_FS, NUM_CLASSES)

    out = gcn_forward(params, adj, src, dst, n_feats, e_feats)
    out = jax.block_until_ready(out)

    ref = gcn_reference(params, adj, src, dst, n_feats, e_feats)
    assert out.shape == (E, NUM_CLASSES), out.shape
    # Tolerance loosened vs the pure-f32 version: the aggregation matmuls run
    # bf16 x bf16 (f32 accumulation) per the perf review.
    np.testing.assert_allclose(np.asarray(out), np.asarray(ref),
                               rtol=2e-2, atol=2e-2)
    print("KERNEL_OK")
</pallas_src>

<mosaic_0001>
module attributes {stable_mosaic.version = 11 : i64} {
  func.func @gcn_fused_kernel(%arg0: i32, %arg1: memref<32xi32, #tpu.memory_space<smem>>, %arg2: memref<32xi32, #tpu.memory_space<smem>>, %arg3: memref<16x16xbf16, #tpu.memory_space<any>>, %arg4: memref<16x8xf32, #tpu.memory_space<vmem>>, %arg5: memref<16x1xf32, #tpu.memory_space<vmem>>, %arg6: memref<16x1xf32, #tpu.memory_space<vmem>>, %arg7: memref<8x16xf32, #tpu.memory_space<vmem>>, %arg8: memref<1x16xf32, #tpu.memory_space<vmem>>, %arg9: memref<1x16xf32, #tpu.memory_space<vmem>>, %arg10: memref<1x16xf32, #tpu.memory_space<vmem>>, %arg11: memref<16x64xf32, #tpu.memory_space<vmem>>, %arg12: memref<1x64xf32, #tpu.memory_space<vmem>>, %arg13: memref<32x4xf32, #tpu.memory_space<vmem>>, %arg14: memref<4x16xf32, #tpu.memory_space<vmem>>, %arg15: memref<1x16xf32, #tpu.memory_space<vmem>>, %arg16: memref<16x32xf32, #tpu.memory_space<vmem>>, %arg17: memref<128x32xf32, #tpu.memory_space<vmem>>, %arg18: memref<1x32xf32, #tpu.memory_space<vmem>>, %arg19: memref<1x32xf32, #tpu.memory_space<vmem>>, %arg20: memref<1x32xf32, #tpu.memory_space<vmem>>, %arg21: memref<32x128xf32, #tpu.memory_space<vmem>>, %arg22: memref<1x128xf32, #tpu.memory_space<vmem>>, %arg23: memref<32x128xf32, #tpu.memory_space<vmem>>, %arg24: memref<16x16xbf16, #tpu.memory_space<vmem>>, %arg25: memref<!tpu.dma_semaphore, #tpu.memory_space<semaphore_mem>>, %arg26: memref<16x64xf32, #tpu.memory_space<vmem>>, %arg27: memref<32x64xf32, #tpu.memory_space<vmem>>, %arg28: memref<32x64xf32, #tpu.memory_space<vmem>>) attributes {dimension_semantics = [#tpu.dimension_semantics<arbitrary>], iteration_bounds = array<i64: 1>, scalar_prefetch = 2 : i64, scratch_operands = 5 : i64, tpu.core_type = #tpu.core_type<tc>, window_params = [{}, {pipeline_mode = #tpu.pipeline_mode<synchronous>, transform_indices = @transform_1, window_bounds = array<i64: 16, 8>}, {pipeline_mode = #tpu.pipeline_mode<synchronous>, transform_indices = @transform_2, window_bounds = array<i64: 16, 1>}, {pipeline_mode = #tpu.pipeline_mode<synchronous>, transform_indices = @transform_3, window_bounds = array<i64: 16, 1>}, {pipeline_mode = #tpu.pipeline_mode<synchronous>, transform_indices = @transform_4, window_bounds = array<i64: 8, 16>}, {pipeline_mode = #tpu.pipeline_mode<synchronous>, transform_indices = @transform_5, window_bounds = array<i64: 1, 16>}, {pipeline_mode = #tpu.pipeline_mode<synchronous>, transform_indices = @transform_6, window_bounds = array<i64: 1, 16>}, {pipeline_mode = #tpu.pipeline_mode<synchronous>, transform_indices = @transform_7, window_bounds = array<i64: 1, 16>}, {pipeline_mode = #tpu.pipeline_mode<synchronous>, transform_indices = @transform_8, window_bounds = array<i64: 16, 64>}, {pipeline_mode = #tpu.pipeline_mode<synchronous>, transform_indices = @transform_9, window_bounds = array<i64: 1, 64>}, {transform_indices = @transform_10, window_bounds = array<i64: 32, 4>}, {pipeline_mode = #tpu.pipeline_mode<synchronous>, transform_indices = @transform_11, window_bounds = array<i64: 4, 16>}, {pipeline_mode = #tpu.pipeline_mode<synchronous>, transform_indices = @transform_12, window_bounds = array<i64: 1, 16>}, {pipeline_mode = #tpu.pipeline_mode<synchronous>, transform_indices = @transform_13, window_bounds = array<i64: 16, 32>}, {pipeline_mode = #tpu.pipeline_mode<synchronous>, transform_indices = @transform_14, window_bounds = array<i64: 128, 32>}, {pipeline_mode = #tpu.pipeline_mode<synchronous>, transform_indices = @transform_15, window_bounds = array<i64: 1, 32>}, {pipeline_mode = #tpu.pipeline_mode<synchronous>, transform_indices = @transform_16, window_bounds = array<i64: 1, 32>}, {pipeline_mode = #tpu.pipeline_mode<synchronous>, transform_indices = @transform_17, window_bounds = array<i64: 1, 32>}, {pipeline_mode = #tpu.pipeline_mode<synchronous>, transform_indices = @transform_18, window_bounds = array<i64: 32, 128>}, {pipeline_mode = #tpu.pipeline_mode<synchronous>, transform_indices = @transform_19, window_bounds = array<i64: 1, 128>}, {transform_indices = @transform_20, window_bounds = array<i64: 32, 128>}]} {
    %c0_i32 = arith.constant 0 : i32
    %0 = arith.cmpi eq, %arg0, %c0_i32 : i32
    %1 = arith.extui %0 : i1 to i32
    %c0_i32_0 = arith.constant 0 : i32
    %2 = arith.cmpi ne, %1, %c0_i32_0 : i32
    scf.if %2 {
      tpu.enqueue_dma source(%arg3 : memref<16x16xbf16, #tpu.memory_space<any>>) target(%arg24 : memref<16x16xbf16, #tpu.memory_space<vmem>>) target_semaphore(%arg25 : memref<!tpu.dma_semaphore, #tpu.memory_space<semaphore_mem>>)
      tpu.wait_dma2 semaphore(%arg25 : memref<!tpu.dma_semaphore, #tpu.memory_space<semaphore_mem>>) src(%arg3 : memref<16x16xbf16, #tpu.memory_space<any>>) dst(%arg24 : memref<16x16xbf16, #tpu.memory_space<vmem>>)
      %c0_39 = arith.constant 0 : index
      %c0_40 = arith.constant 0 : index
      %58 = vector.load %arg24[%c0_39, %c0_40] : memref<16x16xbf16, #tpu.memory_space<vmem>>, vector<16x16xbf16>
      %c0_41 = arith.constant 0 : index
      %c0_42 = arith.constant 0 : index
      %59 = vector.load %arg4[%c0_41, %c0_42] : memref<16x8xf32, #tpu.memory_space<vmem>>, vector<16x8xf32>
      %c0_43 = arith.constant 0 : index
      %c0_44 = arith.constant 0 : index
      %60 = vector.load %arg7[%c0_43, %c0_44] : memref<8x16xf32, #tpu.memory_space<vmem>>, vector<8x16xf32>
      %cst_45 = arith.constant dense<0.000000e+00> : vector<16x16xf32>
      %61 = tpu.matmul %59, %60, %cst_45 {dimension_numbers = #tpu.dot_dimension_numbers<[1], [0], [0], [1], [0, 0, 1, 1], [], []>} : vector<16x8xf32>, vector<8x16xf32>, vector<16x16xf32> -> vector<16x16xf32>
      %c0_46 = arith.constant 0 : index
      %c0_47 = arith.constant 0 : index
      %62 = vector.load %arg5[%c0_46, %c0_47] : memref<16x1xf32, #tpu.memory_space<vmem>>, vector<16x1xf32>
      %63 = vector.broadcast %62 : vector<16x1xf32> to vector<16x16xf32>
      %64 = arith.mulf %61, %63 : vector<16x16xf32>
      %65 = arith.truncf %64 : vector<16x16xf32> to vector<16x16xbf16>
      %cst_48 = arith.constant dense<0.000000e+00> : vector<16x16xf32>
      %66 = tpu.matmul %58, %65, %cst_48 {dimension_numbers = #tpu.dot_dimension_numbers<[1], [0], [0], [1], [0, 0, 1, 1], [], []>} : vector<16x16xbf16>, vector<16x16xbf16>, vector<16x16xf32> -> vector<16x16xf32>
      %c0_49 = arith.constant 0 : index
      %c0_50 = arith.constant 0 : index
      %67 = vector.load %arg6[%c0_49, %c0_50] : memref<16x1xf32, #tpu.memory_space<vmem>>, vector<16x1xf32>
      %68 = vector.broadcast %67 : vector<16x1xf32> to vector<16x16xf32>
      %69 = arith.mulf %66, %68 : vector<16x16xf32>
      %c0_51 = arith.constant 0 : index
      %c0_52 = arith.constant 0 : index
      %70 = vector.load %arg8[%c0_51, %c0_52] : memref<1x16xf32, #tpu.memory_space<vmem>>, vector<1x16xf32>
      %71 = vector.broadcast %70 : vector<1x16xf32> to vector<16x16xf32>
      %72 = arith.addf %69, %71 : vector<16x16xf32>
      %cst_53 = arith.constant 0.000000e+00 : f32
      %73 = vector.broadcast %cst_53 : f32 to vector<16x16xf32>
      %74 = arith.maximumf %72, %73 : vector<16x16xf32>
      %c0_54 = arith.constant 0 : index
      %c0_55 = arith.constant 0 : index
      %75 = vector.load %arg9[%c0_54, %c0_55] : memref<1x16xf32, #tpu.memory_space<vmem>>, vector<1x16xf32>
      %76 = vector.broadcast %75 : vector<1x16xf32> to vector<16x16xf32>
      %77 = arith.mulf %74, %76 : vector<16x16xf32>
      %c0_56 = arith.constant 0 : index
      %c0_57 = arith.constant 0 : index
      %78 = vector.load %arg10[%c0_56, %c0_57] : memref<1x16xf32, #tpu.memory_space<vmem>>, vector<1x16xf32>
      %79 = vector.broadcast %78 : vector<1x16xf32> to vector<16x16xf32>
      %80 = arith.addf %77, %79 : vector<16x16xf32>
      %c0_58 = arith.constant 0 : index
      %c0_59 = arith.constant 0 : index
      %81 = vector.load %arg11[%c0_58, %c0_59] : memref<16x64xf32, #tpu.memory_space<vmem>>, vector<16x64xf32>
      %cst_60 = arith.constant dense<0.000000e+00> : vector<16x64xf32>
      %82 = tpu.matmul %80, %81, %cst_60 {dimension_numbers = #tpu.dot_dimension_numbers<[1], [0], [0], [1], [0, 0, 1, 1], [], []>} : vector<16x16xf32>, vector<16x64xf32>, vector<16x64xf32> -> vector<16x64xf32>
      %c0_61 = arith.constant 0 : index
      %c0_62 = arith.constant 0 : index
      %83 = vector.load %arg5[%c0_61, %c0_62] : memref<16x1xf32, #tpu.memory_space<vmem>>, vector<16x1xf32>
      %84 = vector.broadcast %83 : vector<16x1xf32> to vector<16x64xf32>
      %85 = arith.mulf %82, %84 : vector<16x64xf32>
      %86 = arith.truncf %85 : vector<16x64xf32> to vector<16x64xbf16>
      %cst_63 = arith.constant dense<0.000000e+00> : vector<16x64xf32>
      %87 = tpu.matmul %58, %86, %cst_63 {dimension_numbers = #tpu.dot_dimension_numbers<[1], [0], [0], [1], [0, 0, 1, 1], [], []>} : vector<16x16xbf16>, vector<16x64xbf16>, vector<16x64xf32> -> vector<16x64xf32>
      %c0_64 = arith.constant 0 : index
      %c0_65 = arith.constant 0 : index
      %88 = vector.load %arg6[%c0_64, %c0_65] : memref<16x1xf32, #tpu.memory_space<vmem>>, vector<16x1xf32>
      %89 = vector.broadcast %88 : vector<16x1xf32> to vector<16x64xf32>
      %90 = arith.mulf %87, %89 : vector<16x64xf32>
      %c0_66 = arith.constant 0 : index
      %c0_67 = arith.constant 0 : index
      %91 = vector.load %arg12[%c0_66, %c0_67] : memref<1x64xf32, #tpu.memory_space<vmem>>, vector<1x64xf32>
      %92 = vector.broadcast %91 : vector<1x64xf32> to vector<16x64xf32>
      %93 = arith.addf %90, %92 : vector<16x64xf32>
      %c0_68 = arith.constant 0 : index
      %c0_69 = arith.constant 0 : index
      %94 = vector.load %arg26[%c0_68, %c0_69] : memref<16x64xf32, #tpu.memory_space<vmem>>, vector<16x64xf32>
      tpu.vector_store %arg26[%c0_68, %c0_69], %93 {strides = array<i32>} : memref<16x64xf32, #tpu.memory_space<vmem>>, vector<16x64xf32>,
    } else {
    }
    %c32_i32 = arith.constant 32 : i32
    %3 = arith.muli %arg0, %c32_i32 : i32
    %c0 = arith.constant 0 : index
    %c0_1 = arith.constant 0 : index
    %4 = vector.load %arg13[%c0, %c0_1] : memref<32x4xf32, #tpu.memory_space<vmem>>, vector<32x4xf32>
    %c0_2 = arith.constant 0 : index
    %c0_3 = arith.constant 0 : index
    %5 = vector.load %arg14[%c0_2, %c0_3] : memref<4x16xf32, #tpu.memory_space<vmem>>, vector<4x16xf32>
    %cst = arith.constant dense<0.000000e+00> : vector<32x16xf32>
    %6 = tpu.matmul %4, %5, %cst {dimension_numbers = #tpu.dot_dimension_numbers<[1], [0], [0], [1], [0, 0, 1, 1], [], []>} : vector<32x4xf32>, vector<4x16xf32>, vector<32x16xf32> -> vector<32x16xf32>
    %c0_4 = arith.constant 0 : index
    %c0_5 = arith.constant 0 : index
    %7 = vector.load %arg15[%c0_4, %c0_5] : memref<1x16xf32, #tpu.memory_space<vmem>>, vector<1x16xf32>
    %8 = vector.broadcast %7 : vector<1x16xf32> to vector<32x16xf32>
    %9 = arith.addf %6, %8 : vector<32x16xf32>
    %cst_6 = arith.constant 0.000000e+00 : f32
    %10 = vector.broadcast %cst_6 : f32 to vector<32x16xf32>
    %11 = arith.maximumf %9, %10 : vector<32x16xf32>
    %c0_i32_7 = arith.constant 0 : i32
    %c32_i32_8 = arith.constant 32 : i32
    %12 = arith.addi %c0_i32_7, %c32_i32_8 : i32
    %c1_i32 = arith.constant 1 : i32
    scf.for %arg29 = %c0_i32_7 to %12 step %c1_i32  : i32 {
      %58 = arith.addi %3, %arg29 : i32
      %59 = arith.index_cast %58 : i32 to index
      %60 = memref.load %arg1[%59] : memref<32xi32, #tpu.memory_space<smem>>
      %c0_i32_39 = arith.constant 0 : i32
      %c15_i32 = arith.constant 15 : i32
      %61 = arith.maxsi %c0_i32_39, %60 : i32
      %62 = arith.minsi %c15_i32, %61 : i32
      %63 = arith.addi %3, %arg29 : i32
      %64 = arith.index_cast %63 : i32 to index
      %65 = memref.load %arg2[%64] : memref<32xi32, #tpu.memory_space<smem>>
      %c0_i32_40 = arith.constant 0 : i32
      %c15_i32_41 = arith.constant 15 : i32
      %66 = arith.maxsi %c0_i32_40, %65 : i32
      %67 = arith.minsi %c15_i32_41, %66 : i32
      %68 = arith.index_cast %62 : i32 to index
      %c0_42 = arith.constant 0 : index
      %69 = vector.load %arg26[%68, %c0_42] : memref<16x64xf32, #tpu.memory_space<vmem>>, vector<1x64xf32>
      %70 = arith.index_cast %arg29 : i32 to index
      %c0_43 = arith.constant 0 : index
      %71 = vector.load %arg27[%70, %c0_43] : memref<32x64xf32, #tpu.memory_space<vmem>>, vector<1x64xf32>
      tpu.vector_store %arg27[%70, %c0_43], %69 {strides = array<i32>} : memref<32x64xf32, #tpu.memory_space<vmem>>, vector<1x64xf32>,
      %72 = arith.index_cast %67 : i32 to index
      %c0_44 = arith.constant 0 : index
      %73 = vector.load %arg26[%72, %c0_44] : memref<16x64xf32, #tpu.memory_space<vmem>>, vector<1x64xf32>
      %74 = arith.index_cast %arg29 : i32 to index
      %c0_45 = arith.constant 0 : index
      %75 = vector.load %arg28[%74, %c0_45] : memref<32x64xf32, #tpu.memory_space<vmem>>, vector<1x64xf32>
      tpu.vector_store %arg28[%74, %c0_45], %73 {strides = array<i32>} : memref<32x64xf32, #tpu.memory_space<vmem>>, vector<1x64xf32>,
    }
    %c32_i32_9 = arith.constant 32 : i32
    %c0_10 = arith.constant 0 : index
    %c0_11 = arith.constant 0 : index
    %13 = vector.load %arg27[%c0_10, %c0_11] : memref<32x64xf32, #tpu.memory_space<vmem>>, vector<32x64xf32>
    %c0_12 = arith.constant 0 : index
    %c0_13 = arith.constant 0 : index
    %14 = vector.load %arg28[%c0_12, %c0_13] : memref<32x64xf32, #tpu.memory_space<vmem>>, vector<32x64xf32>
    %15 = tpu.concatenate %13, %14 in 1 : vector<32x64xf32>, vector<32x64xf32> -> vector<32x128xf32>
    %c0_14 = arith.constant 0 : index
    %c0_15 = arith.constant 0 : index
    %16 = vector.load %arg16[%c0_14, %c0_15] : memref<16x32xf32, #tpu.memory_space<vmem>>, vector<16x32xf32>
    %cst_16 = arith.constant dense<0.000000e+00> : vector<32x32xf32>
    %17 = tpu.matmul %11, %16, %cst_16 {dimension_numbers = #tpu.dot_dimension_numbers<[1], [0], [0], [1], [0, 0, 1, 1], [], []>} : vector<32x16xf32>, vector<16x32xf32>, vector<32x32xf32> -> vector<32x32xf32>
    %c0_17 = arith.constant 0 : index
    %c0_18 = arith.constant 0 : index
    %18 = vector.load %arg17[%c0_17, %c0_18] : memref<128x32xf32, #tpu.memory_space<vmem>>, vector<128x32xf32>
    %cst_19 = arith.constant dense<0.000000e+00> : vector<32x32xf32>
    %19 = tpu.matmul %15, %18, %cst_19 {dimension_numbers = #tpu.dot_dimension_numbers<[1], [0], [0], [1], [0, 0, 1, 1], [], []>} : vector<32x128xf32>, vector<128x32xf32>, vector<32x32xf32> -> vector<32x32xf32>
    %20 = arith.addf %17, %19 : vector<32x32xf32>
    %c0_20 = arith.constant 0 : index
    %c0_21 = arith.constant 0 : index
    %21 = vector.load %arg18[%c0_20, %c0_21] : memref<1x32xf32, #tpu.memory_space<vmem>>, vector<1x32xf32>
    %22 = vector.broadcast %21 : vector<1x32xf32> to vector<32x32xf32>
    %23 = arith.addf %20, %22 : vector<32x32xf32>
    %cst_22 = arith.constant 0.000000e+00 : f32
    %24 = vector.broadcast %cst_22 : f32 to vector<32x32xf32>
    %25 = arith.maximumf %23, %24 : vector<32x32xf32>
    %c0_23 = arith.constant 0 : index
    %c0_24 = arith.constant 0 : index
    %26 = vector.load %arg19[%c0_23, %c0_24] : memref<1x32xf32, #tpu.memory_space<vmem>>, vector<1x32xf32>
    %27 = vector.broadcast %26 : vector<1x32xf32> to vector<32x32xf32>
    %28 = arith.mulf %25, %27 : vector<32x32xf32>
    %c0_25 = arith.constant 0 : index
    %c0_26 = arith.constant 0 : index
    %29 = vector.load %arg20[%c0_25, %c0_26] : memref<1x32xf32, #tpu.memory_space<vmem>>, vector<1x32xf32>
    %30 = vector.broadcast %29 : vector<1x32xf32> to vector<32x32xf32>
    %31 = arith.addf %28, %30 : vector<32x32xf32>
    %c0_27 = arith.constant 0 : index
    %c0_28 = arith.constant 0 : index
    %32 = vector.load %arg21[%c0_27, %c0_28] : memref<32x128xf32, #tpu.memory_space<vmem>>, vector<32x128xf32>
    %cst_29 = arith.constant dense<0.000000e+00> : vector<32x128xf32>
    %33 = tpu.matmul %31, %32, %cst_29 {dimension_numbers = #tpu.dot_dimension_numbers<[1], [0], [0], [1], [0, 0, 1, 1], [], []>} : vector<32x32xf32>, vector<32x128xf32>, vector<32x128xf32> -> vector<32x128xf32>
    %c0_30 = arith.constant 0 : index
    %c0_31 = arith.constant 0 : index
    %34 = vector.load %arg22[%c0_30, %c0_31] : memref<1x128xf32, #tpu.memory_space<vmem>>, vector<1x128xf32>
    %35 = vector.broadcast %34 : vector<1x128xf32> to vector<32x128xf32>
    %36 = arith.addf %33, %35 : vector<32x128xf32>
    %cst_32 = arith.constant 0.000000e+00 : f32
    %37 = vector.broadcast %cst_32 : f32 to vector<32x128xf32>
    %38 = arith.maximumf %36, %37 : vector<32x128xf32>
    %39 = tpu.iota {dimensions = array<i32: 1>} : vector<32x128xi32>
    %c5_i32 = arith.constant 5 : i32
    %40 = vector.broadcast %c5_i32 : i32 to vector<32x128xi32>
    %41 = arith.cmpi slt, %39, %40 : vector<32x128xi32>
    %cst_33 = arith.constant -1.000000e+30 : f32
    %42 = vector.broadcast %cst_33 : f32 to vector<32x128xf32>
    %43 = arith.select %41, %38, %42 : vector<32x128xi1>, vector<32x128xf32>
    %cst_34 = arith.constant dense<0xFF800000> : vector<32xf32>
    %44 = vector.multi_reduction <maximumf>, %43, %cst_34 [1] : vector<32x128xf32> to vector<32xf32>
    %45 = vector.shape_cast %44 : vector<32xf32> to vector<32x1xf32>
    %46 = vector.broadcast %45 : vector<32x1xf32> to vector<32x128xf32>
    %47 = arith.subf %38, %46 : vector<32x128xf32>
    %48 = math.exp %47 : vector<32x128xf32>
    %cst_35 = arith.constant 0.000000e+00 : f32
    %49 = vector.broadcast %cst_35 : f32 to vector<32x128xf32>
    %50 = arith.select %41, %48, %49 : vector<32x128xi1>, vector<32x128xf32>
    %cst_36 = arith.constant dense<0.000000e+00> : vector<32xf32>
    %51 = vector.multi_reduction <add>, %50, %cst_36 [1] : vector<32x128xf32> to vector<32xf32>
    %52 = vector.shape_cast %51 : vector<32xf32> to vector<32x1xf32>
    %53 = math.log %52 : vector<32x1xf32>
    %54 = arith.addf %45, %53 : vector<32x1xf32>
    %55 = vector.broadcast %54 : vector<32x1xf32> to vector<32x128xf32>
    %56 = arith.subf %38, %55 : vector<32x128xf32>
    %c0_37 = arith.constant 0 : index
    %c0_38 = arith.constant 0 : index
    %57 = vector.load %arg23[%c0_37, %c0_38] : memref<32x128xf32, #tpu.memory_space<vmem>>, vector<32x128xf32>
    tpu.vector_store %arg23[%c0_37, %c0_38], %56 {strides = array<i32>} : memref<32x128xf32, #tpu.memory_space<vmem>>, vector<32x128xf32>,
    return
  }
  func.func @transform_1(%arg0: i32, %arg1: memref<32xi32, #tpu.memory_space<smem>>, %arg2: memref<32xi32, #tpu.memory_space<smem>>) -> (i32, i32) {
    %c0_i32 = arith.constant 0 : i32
    %c0_i32_0 = arith.constant 0 : i32
    %c0_i32_1 = arith.constant 0 : i32
    return %c0_i32, %c0_i32_0 : i32, i32
  }
  func.func @transform_2(%arg0: i32, %arg1: memref<32xi32, #tpu.memory_space<smem>>, %arg2: memref<32xi32, #tpu.memory_space<smem>>) -> (i32, i32) {
    %c0_i32 = arith.constant 0 : i32
    %c0_i32_0 = arith.constant 0 : i32
    %c0_i32_1 = arith.constant 0 : i32
    return %c0_i32, %c0_i32_0 : i32, i32
  }
  func.func @transform_3(%arg0: i32, %arg1: memref<32xi32, #tpu.memory_space<smem>>, %arg2: memref<32xi32, #tpu.memory_space<smem>>) -> (i32, i32) {
    %c0_i32 = arith.constant 0 : i32
    %c0_i32_0 = arith.constant 0 : i32
    %c0_i32_1 = arith.constant 0 : i32
    return %c0_i32, %c0_i32_0 : i32, i32
  }
  func.func @transform_4(%arg0: i32, %arg1: memref<32xi32, #tpu.memory_space<smem>>, %arg2: memref<32xi32, #tpu.memory_space<smem>>) -> (i32, i32) {
    %c0_i32 = arith.constant 0 : i32
    %c0_i32_0 = arith.constant 0 : i32
    %c0_i32_1 = arith.constant 0 : i32
    return %c0_i32, %c0_i32_0 : i32, i32
  }
  func.func @transform_5(%arg0: i32, %arg1: memref<32xi32, #tpu.memory_space<smem>>, %arg2: memref<32xi32, #tpu.memory_space<smem>>) -> (i32, i32) {
    %c0_i32 = arith.constant 0 : i32
    %c0_i32_0 = arith.constant 0 : i32
    %c0_i32_1 = arith.constant 0 : i32
    return %c0_i32, %c0_i32_0 : i32, i32
  }
  func.func @transform_6(%arg0: i32, %arg1: memref<32xi32, #tpu.memory_space<smem>>, %arg2: memref<32xi32, #tpu.memory_space<smem>>) -> (i32, i32) {
    %c0_i32 = arith.constant 0 : i32
    %c0_i32_0 = arith.constant 0 : i32
    %c0_i32_1 = arith.constant 0 : i32
    return %c0_i32, %c0_i32_0 : i32, i32
  }
  func.func @transform_7(%arg0: i32, %arg1: memref<32xi32, #tpu.memory_space<smem>>, %arg2: memref<32xi32, #tpu.memory_space<smem>>) -> (i32, i32) {
    %c0_i32 = arith.constant 0 : i32
    %c0_i32_0 = arith.constant 0 : i32
    %c0_i32_1 = arith.constant 0 : i32
    return %c0_i32, %c0_i32_0 : i32, i32
  }
  func.func @transform_8(%arg0: i32, %arg1: memref<32xi32, #tpu.memory_space<smem>>, %arg2: memref<32xi32, #tpu.memory_space<smem>>) -> (i32, i32) {
    %c0_i32 = arith.constant 0 : i32
    %c0_i32_0 = arith.constant 0 : i32
    %c0_i32_1 = arith.constant 0 : i32
    return %c0_i32, %c0_i32_0 : i32, i32
  }
  func.func @transform_9(%arg0: i32, %arg1: memref<32xi32, #tpu.memory_space<smem>>, %arg2: memref<32xi32, #tpu.memory_space<smem>>) -> (i32, i32) {
    %c0_i32 = arith.constant 0 : i32
    %c0_i32_0 = arith.constant 0 : i32
    %c0_i32_1 = arith.constant 0 : i32
    return %c0_i32, %c0_i32_0 : i32, i32
  }
  func.func @transform_10(%arg0: i32, %arg1: memref<32xi32, #tpu.memory_space<smem>>, %arg2: memref<32xi32, #tpu.memory_space<smem>>) -> (i32, i32) {
    %c0_i32 = arith.constant 0 : i32
    %c0_i32_0 = arith.constant 0 : i32
    return %arg0, %c0_i32 : i32, i32
  }
  func.func @transform_11(%arg0: i32, %arg1: memref<32xi32, #tpu.memory_space<smem>>, %arg2: memref<32xi32, #tpu.memory_space<smem>>) -> (i32, i32) {
    %c0_i32 = arith.constant 0 : i32
    %c0_i32_0 = arith.constant 0 : i32
    %c0_i32_1 = arith.constant 0 : i32
    return %c0_i32, %c0_i32_0 : i32, i32
  }
  func.func @transform_12(%arg0: i32, %arg1: memref<32xi32, #tpu.memory_space<smem>>, %arg2: memref<32xi32, #tpu.memory_space<smem>>) -> (i32, i32) {
    %c0_i32 = arith.constant 0 : i32
    %c0_i32_0 = arith.constant 0 : i32
    %c0_i32_1 = arith.constant 0 : i32
    return %c0_i32, %c0_i32_0 : i32, i32
  }
  func.func @transform_13(%arg0: i32, %arg1: memref<32xi32, #tpu.memory_space<smem>>, %arg2: memref<32xi32, #tpu.memory_space<smem>>) -> (i32, i32) {
    %c0_i32 = arith.constant 0 : i32
    %c0_i32_0 = arith.constant 0 : i32
    %c0_i32_1 = arith.constant 0 : i32
    return %c0_i32, %c0_i32_0 : i32, i32
  }
  func.func @transform_14(%arg0: i32, %arg1: memref<32xi32, #tpu.memory_space<smem>>, %arg2: memref<32xi32, #tpu.memory_space<smem>>) -> (i32, i32) {
    %c0_i32 = arith.constant 0 : i32
    %c0_i32_0 = arith.constant 0 : i32
    %c0_i32_1 = arith.constant 0 : i32
    return %c0_i32, %c0_i32_0 : i32, i32
  }
  func.func @transform_15(%arg0: i32, %arg1: memref<32xi32, #tpu.memory_space<smem>>, %arg2: memref<32xi32, #tpu.memory_space<smem>>) -> (i32, i32) {
    %c0_i32 = arith.constant 0 : i32
    %c0_i32_0 = arith.constant 0 : i32
    %c0_i32_1 = arith.constant 0 : i32
    return %c0_i32, %c0_i32_0 : i32, i32
  }
  func.func @transform_16(%arg0: i32, %arg1: memref<32xi32, #tpu.memory_space<smem>>, %arg2: memref<32xi32, #tpu.memory_space<smem>>) -> (i32, i32) {
    %c0_i32 = arith.constant 0 : i32
    %c0_i32_0 = arith.constant 0 : i32
    %c0_i32_1 = arith.constant 0 : i32
    return %c0_i32, %c0_i32_0 : i32, i32
  }
  func.func @transform_17(%arg0: i32, %arg1: memref<32xi32, #tpu.memory_space<smem>>, %arg2: memref<32xi32, #tpu.memory_space<smem>>) -> (i32, i32) {
    %c0_i32 = arith.constant 0 : i32
    %c0_i32_0 = arith.constant 0 : i32
    %c0_i32_1 = arith.constant 0 : i32
    return %c0_i32, %c0_i32_0 : i32, i32
  }
  func.func @transform_18(%arg0: i32, %arg1: memref<32xi32, #tpu.memory_space<smem>>, %arg2: memref<32xi32, #tpu.memory_space<smem>>) -> (i32, i32) {
    %c0_i32 = arith.constant 0 : i32
    %c0_i32_0 = arith.constant 0 : i32
    %c0_i32_1 = arith.constant 0 : i32
    return %c0_i32, %c0_i32_0 : i32, i32
  }
  func.func @transform_19(%arg0: i32, %arg1: memref<32xi32, #tpu.memory_space<smem>>, %arg2: memref<32xi32, #tpu.memory_space<smem>>) -> (i32, i32) {
    %c0_i32 = arith.constant 0 : i32
    %c0_i32_0 = arith.constant 0 : i32
    %c0_i32_1 = arith.constant 0 : i32
    return %c0_i32, %c0_i32_0 : i32, i32
  }
  func.func @transform_20(%arg0: i32, %arg1: memref<32xi32, #tpu.memory_space<smem>>, %arg2: memref<32xi32, #tpu.memory_space<smem>>) -> (i32, i32) {
    %c0_i32 = arith.constant 0 : i32
    %c0_i32_0 = arith.constant 0 : i32
    return %arg0, %c0_i32 : i32, i32
  }
}

</mosaic_0001>

<llo_original>
// kernel: tpu_custom_call.1
$region0: #{tpu_custom_call.1}
  #allocation0 [shape = 'u32[]', space=smem, size = 0x4, offset = 0x4, fixed_abs, tag = 'smem constant byte address 0x4 - core index']
  #allocation1 [shape = 'u32[144,128]{1,0:T(1,128)}', space=vmem, size = 0x12000, scoped, tag = 'internal scratch']
  #allocation2 [shape = 'bf16[16,16]{1,0:T(8,128)(2,1)}', space=vmem, size = 0x1000, scoped, tag = 'scratch operand']
  #allocation3 [shape = 's32[1]{0}', space=sflag, size = 0x4, scoped, tag = 'scratch operand']
  #allocation4 [shape = 'f32[16,64]{1,0:T(8,128)}', space=vmem, size = 0x2000, scoped, tag = 'scratch operand']
  #allocation5 [shape = 'f32[32,64]{1,0:T(8,128)}', space=vmem, size = 0x4000, scoped, tag = 'scratch operand']
  #allocation6 [shape = 'f32[32,64]{1,0:T(8,128)}', space=vmem, size = 0x4000, scoped, tag = 'scratch operand']
  #allocation7 [shape = 's32[1]{0}', space=sflag, size = 0x4, scoped, tag = 'scoped memory for tpu_custom_call.1']
  #allocation8 [shape = 'u8[512]{0}', space=smem, size = 0x200, scoped, tag = 'prefetched SMEM operand 0']
  #allocation9 [shape = 'u8[512]{0}', space=smem, size = 0x200, scoped, tag = 'prefetched SMEM operand 1']
  #allocation12 [shape = 's32[]', space=sflag, size = 0x4, offset = 0, fixed_abs, tag = 'sflag constant byte address 0x0 - dummy sync flag']
  %s0 = inlined_call_operand.vmem [shape: s32[32], index: 0, kind: input, shape index: {}]
  %s1 = inlined_call_operand.vmem [shape: s32[32], index: 1, kind: input, shape index: {}]
  %s2 = inlined_call_operand.vmem [shape: bf16[16,16], index: 2, kind: input, shape index: {}]
  %s3 = inlined_call_operand.vmem [shape: f32[16,8], index: 3, kind: input, shape index: {}]
  %s4 = inlined_call_operand.vmem [shape: f32[16,1], index: 4, kind: input, shape index: {}]
  %s5 = inlined_call_operand.vmem [shape: f32[16,1], index: 5, kind: input, shape index: {}]
  %s6 = inlined_call_operand.vmem [shape: f32[8,16], index: 6, kind: input, shape index: {}]
  %s7 = inlined_call_operand.vmem [shape: f32[1,16], index: 7, kind: input, shape index: {}]
  %s8 = inlined_call_operand.vmem [shape: f32[1,16], index: 8, kind: input, shape index: {}]
  %s9 = inlined_call_operand.vmem [shape: f32[1,16], index: 9, kind: input, shape index: {}]
  %s10 = inlined_call_operand.vmem [shape: f32[16,64], index: 10, kind: input, shape index: {}]
  %s11 = inlined_call_operand.vmem [shape: f32[1,64], index: 11, kind: input, shape index: {}]
  %s12 = inlined_call_operand.vmem [shape: f32[32,4], index: 12, kind: input, shape index: {}]
  %s13 = inlined_call_operand.vmem [shape: f32[4,16], index: 13, kind: input, shape index: {}]
  %s14 = inlined_call_operand.vmem [shape: f32[1,16], index: 14, kind: input, shape index: {}]
  %s15 = inlined_call_operand.vmem [shape: f32[16,32], index: 15, kind: input, shape index: {}]
  %s16 = inlined_call_operand.vmem [shape: f32[128,32], index: 16, kind: input, shape index: {}]
  %s17 = inlined_call_operand.vmem [shape: f32[1,32], index: 17, kind: input, shape index: {}]
  %s18 = inlined_call_operand.vmem [shape: f32[1,32], index: 18, kind: input, shape index: {}]
  %s19 = inlined_call_operand.vmem [shape: f32[1,32], index: 19, kind: input, shape index: {}]
  %s20 = inlined_call_operand.vmem [shape: f32[32,128], index: 20, kind: input, shape index: {}]
  %s21 = inlined_call_operand.vmem [shape: f32[1,128], index: 21, kind: input, shape index: {}]
  %s22 = inlined_call_operand.hbm [shape: f32[32,128], index: 22, kind: output, shape index: {}]
  %s23 = sld [smem:[#allocation0]]
  $region131: #{tpu_custom_call.1} parent=0
    _
  %s25 = ssub.s32 1, %s23
  %s26 = scalar_select 0, %s25, %s23
  %s27 = sshll.u32 %s0, 4
  %s28 = int_to_ptr.vmem [resolvable:$true] %s27
  %30 = dma.vmem_to_smem %s28, 16, [#allocation8], [#allocation7]
  %s31 = sshll.u32 %s1, 4
  %s32 = int_to_ptr.vmem [resolvable:$true] %s31
  %34 = dma.vmem_to_smem %s32, 16, [#allocation9], [#allocation7]
  %35 = dma.done [#allocation7], 32
  %36 = sfence
  $region1: #{tpu_custom_call.1} parent=0
    #allocation10 [shape = 'u8[16384]{0}', space=vmem, size = 0x4000, scoped, tag = 'output window, operand 0, single buffered']
    #allocation11 [shape = 's32[1]{0}', space=sflag, size = 0x4, scoped, tag = 'scoped memory for tpu_custom_call.1']
    %37 = vsyncpa [#allocation11], 0
    // Predicated region
    $region2: #{tpu_custom_call.1} parent=1 // pred_check
      _
    $region3: #{tpu_custom_call.1} parent=1 // pred_check_branch
      %39 = sbr.rel (0) target = $region5
    $region4: #{tpu_custom_call.1} parent=1 // pred_region
      _
    $region5: #{tpu_custom_call.1} parent=1 // pred_fallthru
      _
    // Predicated region
    $region6: #{tpu_custom_call.1} parent=1 // pred_check
      _
    $region7: #{tpu_custom_call.1} parent=1 // pred_check_branch
      %41 = sbr.rel (0) target = $region9
    $region8: #{tpu_custom_call.1} parent=1 // pred_region
      _
    $region9: #{tpu_custom_call.1} parent=1 // pred_fallthru
      _
    // Predicated region
    $region10: #{tpu_custom_call.1} parent=1 // pred_check
      _
    $region11: #{tpu_custom_call.1} parent=1 // pred_check_branch
      %43 = sbr.rel (0) target = $region13
    $region12: #{tpu_custom_call.1} parent=1 // pred_region
      _
    $region13: #{tpu_custom_call.1} parent=1 // pred_fallthru
      _
    // Predicated region
    $region14: #{tpu_custom_call.1} parent=1 // pred_check
      _
    $region15: #{tpu_custom_call.1} parent=1 // pred_check_branch
      %45 = sbr.rel (0) target = $region17
    $region16: #{tpu_custom_call.1} parent=1 // pred_region
      _
    $region17: #{tpu_custom_call.1} parent=1 // pred_fallthru
      _
    // Predicated region
    $region18: #{tpu_custom_call.1} parent=1 // pred_check
      _
    $region19: #{tpu_custom_call.1} parent=1 // pred_check_branch
      %47 = sbr.rel (0) target = $region21
    $region20: #{tpu_custom_call.1} parent=1 // pred_region
      _
    $region21: #{tpu_custom_call.1} parent=1 // pred_fallthru
      _
    // Predicated region
    $region22: #{tpu_custom_call.1} parent=1 // pred_check
      _
    $region23: #{tpu_custom_call.1} parent=1 // pred_check_branch
      %49 = sbr.rel (0) target = $region25
    $region24: #{tpu_custom_call.1} parent=1 // pred_region
      _
    $region25: #{tpu_custom_call.1} parent=1 // pred_fallthru
      _
    // Predicated region
    $region26: #{tpu_custom_call.1} parent=1 // pred_check
      _
    $region27: #{tpu_custom_call.1} parent=1 // pred_check_branch
      %51 = sbr.rel (0) target = $region29
    $region28: #{tpu_custom_call.1} parent=1 // pred_region
      _
    $region29: #{tpu_custom_call.1} parent=1 // pred_fallthru
      _
    // Predicated region
    $region30: #{tpu_custom_call.1} parent=1 // pred_check
      _
    $region31: #{tpu_custom_call.1} parent=1 // pred_check_branch
      %53 = sbr.rel (0) target = $region33
    $region32: #{tpu_custom_call.1} parent=1 // pred_region
      _
    $region33: #{tpu_custom_call.1} parent=1 // pred_fallthru
      _
    // Predicated region
    $region34: #{tpu_custom_call.1} parent=1 // pred_check
      _
    $region35: #{tpu_custom_call.1} parent=1 // pred_check_branch
      %55 = sbr.rel (0) target = $region37
    $region36: #{tpu_custom_call.1} parent=1 // pred_region
      _
    $region37: #{tpu_custom_call.1} parent=1 // pred_fallthru
      _
    // Predicated region
    $region38: #{tpu_custom_call.1} parent=1 // pred_check
      _
    $region39: #{tpu_custom_call.1} parent=1 // pred_check_branch
      %57 = sbr.rel (0) target = $region41
    $region40: #{tpu_custom_call.1} parent=1 // pred_region
      _
    $region41: #{tpu_custom_call.1} parent=1 // pred_fallthru
      _
    // Predicated region
    $region42: #{tpu_custom_call.1} parent=1 // pred_check
      _
    $region43: #{tpu_custom_call.1} parent=1 // pred_check_branch
      %59 = sbr.rel (0) target = $region45
    $region44: #{tpu_custom_call.1} parent=1 // pred_region
      _
    $region45: #{tpu_custom_call.1} parent=1 // pred_fallthru
      _
    // Predicated region
    $region46: #{tpu_custom_call.1} parent=1 // pred_check
      _
    $region47: #{tpu_custom_call.1} parent=1 // pred_check_branch
      %61 = sbr.rel (0) target = $region49
    $region48: #{tpu_custom_call.1} parent=1 // pred_region
      _
    $region49: #{tpu_custom_call.1} parent=1 // pred_fallthru
      _
    // Predicated region
    $region50: #{tpu_custom_call.1} parent=1 // pred_check
      _
    $region51: #{tpu_custom_call.1} parent=1 // pred_check_branch
      %63 = sbr.rel (0) target = $region53
    $region52: #{tpu_custom_call.1} parent=1 // pred_region
      _
    $region53: #{tpu_custom_call.1} parent=1 // pred_fallthru
      _
    // Predicated region
    $region54: #{tpu_custom_call.1} parent=1 // pred_check
      _
    $region55: #{tpu_custom_call.1} parent=1 // pred_check_branch
      %65 = sbr.rel (0) target = $region57
    $region56: #{tpu_custom_call.1} parent=1 // pred_region
      _
    $region57: #{tpu_custom_call.1} parent=1 // pred_fallthru
      _
    // Predicated region
    $region58: #{tpu_custom_call.1} parent=1 // pred_check
      _
    $region59: #{tpu_custom_call.1} parent=1 // pred_check_branch
      %67 = sbr.rel (0) target = $region61
    $region60: #{tpu_custom_call.1} parent=1 // pred_region
      _
    $region61: #{tpu_custom_call.1} parent=1 // pred_fallthru
      _
    // Predicated region
    $region62: #{tpu_custom_call.1} parent=1 // pred_check
      _
    $region63: #{tpu_custom_call.1} parent=1 // pred_check_branch
      %69 = sbr.rel (0) target = $region65
    $region64: #{tpu_custom_call.1} parent=1 // pred_region
      _
    $region65: #{tpu_custom_call.1} parent=1 // pred_fallthru
      _
    // Predicated region
    $region66: #{tpu_custom_call.1} parent=1 // pred_check
      _
    $region67: #{tpu_custom_call.1} parent=1 // pred_check_branch
      %71 = sbr.rel (0) target = $region69
    $region68: #{tpu_custom_call.1} parent=1 // pred_region
      _
    $region69: #{tpu_custom_call.1} parent=1 // pred_fallthru
      _
    // Predicated region
    $region70: #{tpu_custom_call.1} parent=1 // pred_check
      _
    $region71: #{tpu_custom_call.1} parent=1 // pred_check_branch
      %73 = sbr.rel (0) target = $region73
    $region72: #{tpu_custom_call.1} parent=1 // pred_region
      _
    $region73: #{tpu_custom_call.1} parent=1 // pred_fallthru
      _
    // Predicated region
    $region74: #{tpu_custom_call.1} parent=1 // pred_check
      _
    $region75: #{tpu_custom_call.1} parent=1 // pred_check_branch
      %75 = sbr.rel (0) target = $region77
    $region76: #{tpu_custom_call.1} parent=1 // pred_region
      _
    $region77: #{tpu_custom_call.1} parent=1 // pred_fallthru
      _
    %p77 = scmp.eq.s32.totalorder 0, 0
    // Predicated region
    $region78: #{tpu_custom_call.1} parent=1 // pred_check
      %p78 = pneg %p77
    $region79: #{tpu_custom_call.1} parent=1 // pred_check_branch
      %80 = sbr.rel (%p78) target = $region81
    $region80: #{tpu_custom_call.1} parent=1 // pred_region
      %p82 = scmp.lt.u32.totalorder 8, 8
      %p83 = pneg %p82
      // Predicated region
      $region82: #{tpu_custom_call.1} parent=80 // pred_check
        _
      $region83: #{tpu_custom_call.1} parent=80 // pred_check_branch
        %85 = sbr.rel (%p82) target = $region85
      $region84: #{tpu_custom_call.1} parent=80 // pred_region
        %s101 = sand.u32 8, 7
        %p102 = scmp.eq.s32.totalorder %s101, 0
        // Predicated region
        $region97: #{tpu_custom_call.1} parent=84 // pred_check
          %p103 = pneg %p102
        $region98: #{tpu_custom_call.1} parent=84 // pred_check_branch
          %105 = sbr.rel (%p103) target = $region100
        $region99: #{tpu_custom_call.1} parent=84 // pred_region
          loop: start=0, step=1, limit=1
          $region101: #{tpu_custom_call.1} parent=99 // loop_pre_header
            _
          $region102: #{tpu_custom_call.1} parent=99 // loop_header
            %s107 = sphi 0, %s111
            %p108 = scmp.ge.s32.totalorder %s107, 1
            %s112 = sphi %s2, %s2
            %s113 = sphi [#allocation2], [#allocation2]
          $region103: #{tpu_custom_call.1} parent=99 // loop_header_branch
            %110 = sbr.rel (%p108) target = $region107
          $region104: #{tpu_custom_call.1} parent=99 // loop_body
            %v114 = vld [vmem:[%s112] sm:$0xff]
            %115 = vst [vmem:[%s113] sm:$0xff] %v114
          $region105: #{tpu_custom_call.1} parent=99 // loop_footer
            %s111 = sadd.s32 1, %s107
          $region106: #{tpu_custom_call.1} parent=99 // loop_footer_branch
            %106 = sbr.rel target = $region102
          $region107: #{tpu_custom_call.1} parent=99 // loop_exit
            _
        $region100: #{tpu_custom_call.1} parent=84 // pred_fallthru
          _
        %p116 = pneg %p102
        // Predicated region
        $region108: #{tpu_custom_call.1} parent=84 // pred_check
          _
        $region109: #{tpu_custom_call.1} parent=84 // pred_check_branch
          %118 = sbr.rel (%p102) target = $region111
        $region110: #{tpu_custom_call.1} parent=84 // pred_region
          %s119 = sand.u32 8, 7
        $region111: #{tpu_custom_call.1} parent=84 // pred_fallthru
          _
      $region85: #{tpu_custom_call.1} parent=80 // pred_fallthru
        _
      // Predicated region
      $region86: #{tpu_custom_call.1} parent=80 // pred_check
        %p86 = pneg %p82
      $region87: #{tpu_custom_call.1} parent=80 // pred_check_branch
        %88 = sbr.rel (%p86) target = $region89
      $region88: #{tpu_custom_call.1} parent=80 // pred_region
        %s89 = sshll.u32 1, 8
        %s90 = ssub.s32 %s89, 1
        loop: start=0, step=1, limit=1
        $region90: #{tpu_custom_call.1} parent=88 // loop_pre_header
          _
        $region91: #{tpu_custom_call.1} parent=88 // loop_header
          %s92 = sphi 0, %s96
          %p93 = scmp.ge.s32.totalorder %s92, 1
          %s97 = sphi %s2, %s2
          %s98 = sphi [#allocation2], [#allocation2]
        $region92: #{tpu_custom_call.1} parent=88 // loop_header_branch
          %95 = sbr.rel (%p93) target = $region96
        $region93: #{tpu_custom_call.1} parent=88 // loop_body
          %v99 = vld [vmem:[%s97] sm:%s90]
          %100 = vst [vmem:[%s98] sm:%s90] %v99
        $region94: #{tpu_custom_call.1} parent=88 // loop_footer
          %s96 = sadd.s32 1, %s92
        $region95: #{tpu_custom_call.1} parent=88 // loop_footer_branch
          %91 = sbr.rel target = $region91
        $region96: #{tpu_custom_call.1} parent=88 // loop_exit
          _
      $region89: #{tpu_custom_call.1} parent=80 // pred_fallthru
        _
      // Predicated region
      $region112: #{tpu_custom_call.1} parent=80 // pred_check
        _
      $region113: #{tpu_custom_call.1} parent=80 // pred_check_branch
        %122 = sbr.rel (0) target = $region115
      $region114: #{tpu_custom_call.1} parent=80 // pred_region
        %123 = vsyncadd [#allocation3], 128
      $region115: #{tpu_custom_call.1} parent=80 // pred_fallthru
        _
      %s124 = smul.u32 4, 2
      %s125 = smul.u32 %s124, 1
      %s126 = sshll.u32 %s125, 4
      %127 = dma.done [#allocation3], %s126
      %v128 = vld [vmem:[#allocation2] sm:$0xf]
      %v129 = vld [vmem:[#allocation2 + $0x4] sm:$0xf]
      %v130 = vld [vmem:[%s3] sm:$0xff]
      %v131 = vld [vmem:[%s3 + $0x8] sm:$0xff]
      %v132 = vld [vmem:[%s6] sm:$0xff]
      %vm133 = vcmask 64512
      %v135 = vsel %vm133, %v130, 0
      %v138 = vsel %vm133, %v131, 0
      %140 = vmatprep.subr.mxu0 0.0
      %141 = vmatpush1.msra.mxu0 0.0
      %142 = vmatprep.subr.mxu0 0.0
      %143 = vmatpush1.msra.mxu0 0.0
      %144 = vmatprep.subr.mxu0 0.0
      %145 = vmatpush1.msra.mxu0 0.0
      %146 = vmatprep.subr.mxu0 0.0
      %147 = vmatpush1.msra.mxu0 0.0
      %148 = vmatprep.subr.mxu0 0.0
      %149 = vmatpush1.msra.mxu0 0.0
      %150 = vmatprep.subr.mxu0 0.0
      %151 = vmatpush1.msra.mxu0 0.0
      %152 = vmatprep.subr.mxu0 0.0
      %153 = vmatpush1.msra.mxu0 0.0
      %154 = vmatprep.subr.mxu0 0.0
      %155 = vmatpush1.msra.mxu0 0.0
      %156 = vmatprep.subr.mxu0 0.0
      %157 = vmatpush1.msra.mxu0 0.0
      %158 = vmatprep.subr.mxu0 0.0
      %159 = vmatpush1.msra.mxu0 0.0
      %160 = vmatprep.subr.mxu0 0.0
      %161 = vmatpush1.msra.mxu0 0.0
      %162 = vmatprep.subr.mxu0 0.0
      %163 = vmatpush1.msra.mxu0 0.0
      %164 = vmatprep.subr.mxu0 0.0
      %165 = vmatpush1.msra.mxu0 0.0
      %166 = vmatprep.subr.mxu0 0.0
      %167 = vmatpush1.msra.mxu0 0.0
      %168 = vmatprep.subr.mxu0 0.0
      %169 = vmatpush1.msra.mxu0 0.0
      %170 = vmatprep.subr.mxu0 0.0
      %171 = vmatpush1.msra.mxu0 %v132
      %172 = vmatprep.subr.mxu0 0.0
      %173 = vmatpush2.msra.mxu0 0.0
      %174 = vmatprep.subr.mxu0 0.0
      %175 = vmatpush2.msra.mxu0 0.0
      %176 = vmatprep.subr.mxu0 0.0
      %177 = vmatpush2.msra.mxu0 0.0
      %178 = vmatprep.subr.mxu0 0.0
      %179 = vmatpush2.msra.mxu0 0.0
      %180 = vmatprep.subr.mxu0 0.0
      %181 = vmatpush2.msra.mxu0 0.0
      %182 = vmatprep.subr.mxu0 0.0
      %183 = vmatpush2.msra.mxu0 0.0
      %184 = vmatprep.subr.mxu0 0.0
      %185 = vmatpush2.msra.mxu0 0.0
      %186 = vmatprep.subr.mxu0 0.0
      %187 = vmatpush2.msra.mxu0 0.0
      %188 = vmatprep.subr.mxu0 0.0
      %189 = vmatpush2.msra.mxu0 0.0
      %190 = vmatprep.subr.mxu0 0.0
      %191 = vmatpush2.msra.mxu0 0.0
      %192 = vmatprep.subr.mxu0 0.0
      %193 = vmatpush2.msra.mxu0 0.0
      %194 = vmatprep.subr.mxu0 0.0
      %195 = vmatpush2.msra.mxu0 0.0
      %196 = vmatprep.subr.mxu0 0.0
      %197 = vmatpush2.msra.mxu0 0.0
      %198 = vmatprep.subr.mxu0 0.0
      %199 = vmatpush2.msra.mxu0 0.0
      %200 = vmatprep.subr.mxu0 0.0
      %201 = vmatpush2.msra.mxu0 0.0
      %202 = vmatprep.subr.mxu0 0.0
      %203 = vmatpush2.msra.mxu0 0.0
      %204 = vmatprep.mubr.f32.mxu0 0.0
      %205 = vmatmul.mubr.f32.gmra.mxu0 %v135
      %v206 = vpop.f32.mrf.mxu0
      %v207 = vadd.f32 0.0, %v206
      %v208 = vpop.f32.mrf.mxu0
      %209 = vmatprep.mubr.f32.mxu0 0.0
      %210 = vmatmul.mubr.f32.gmra.mxu0 %v138
      %v211 = vpop.f32.mrf.mxu0
      %v212 = vadd.f32 0.0, %v211
      %v213 = vpop.f32.mrf.mxu0
      %214 = vdwg.mxu0
      %v215 = vld [vmem:[%s4] sm:$0xff]
      %v216 = vld [vmem:[%s4 + $0x8] sm:$0xff]
      %218 = vset.pattern.permute.xlu0 0
      %219 = vperm.xlu0 %218, %v215
      %v220 = vpop.permute.xlu0 %219
      %223 = vset.pattern.permute.xlu0 0
      %224 = vperm.xlu0 %223, %v216
      %v225 = vpop.permute.xlu0 %224
      %v227 = vmul.f32 %v207, %v220
      %v228 = vmul.f32 %v212, %v225
      %v229 = vpack.c.bf16 %v228, %v227
      %v232 = vunpack.c.l.b16 %v128
      %v233 = vunpack.c.l.b16 %v129
      %v234 = vpack.c.b16 %v233, %v232
      %vm235 = vcmask 130048
      %v237 = vsel %vm235, %v234, 0
      %239 = vmatprep.subr.bf16.mxu0 0
      %240 = vmatpush1.bf16.msra.mxu0 0
      %241 = vmatprep.subr.bf16.mxu0 0
      %242 = vmatpush1.bf16.msra.mxu0 0
      %243 = vmatprep.subr.bf16.mxu0 0
      %244 = vmatpush1.bf16.msra.mxu0 0
      %245 = vmatprep.subr.bf16.mxu0 0
      %246 = vmatpush1.bf16.msra.mxu0 0
      %247 = vmatprep.subr.bf16.mxu0 0
      %248 = vmatpush1.bf16.msra.mxu0 0
      %249 = vmatprep.subr.bf16.mxu0 0
      %250 = vmatpush1.bf16.msra.mxu0 0
      %251 = vmatprep.subr.bf16.mxu0 0
      %252 = vmatpush1.bf16.msra.mxu0 0
      %253 = vmatprep.subr.bf16.mxu0 0
      %254 = vmatpush1.bf16.msra.mxu0 %v229
      %255 = vmatprep.subr.bf16.mxu0 0
      %256 = vmatpush2.bf16.msra.mxu0 0
      %257 = vmatprep.subr.bf16.mxu0 0
      %258 = vmatpush2.bf16.msra.mxu0 0
      %259 = vmatprep.subr.bf16.mxu0 0
      %260 = vmatpush2.bf16.msra.mxu0 0
      %261 = vmatprep.subr.bf16.mxu0 0
      %262 = vmatpush2.bf16.msra.mxu0 0
      %263 = vmatprep.subr.bf16.mxu0 0
      %264 = vmatpush2.bf16.msra.mxu0 0
      %265 = vmatprep.subr.bf16.mxu0 0
      %266 = vmatpush2.bf16.msra.mxu0 0
      %267 = vmatprep.subr.bf16.mxu0 0
      %268 = vmatpush2.bf16.msra.mxu0 0
      %269 = vmatprep.subr.bf16.mxu0 0
      %270 = vmatpush2.bf16.msra.mxu0 0
      %271 = vmatprep.mubr.bf16.mxu0 0
      %272 = vmatmul.mubr.bf16.gmra.mxu0 %v237
      %v273 = vpop.f32.mrf.mxu0
      %v274 = vadd.f32 0.0, %v273
      %v275 = vpop.f32.mrf.mxu0
      %v276 = vpop.f32.mrf.mxu0
      %v277 = vadd.f32 0.0, %v276
      %v278 = vpop.f32.mrf.mxu0
      %279 = vdwg.mxu0
      %v280 = vld [vmem:[%s5] sm:$0xff]
      %v281 = vld [vmem:[%s5 + $0x8] sm:$0xff]
      %283 = vset.pattern.permute.xlu0 0
      %284 = vperm.xlu0 %283, %v280
      %v285 = vpop.permute.xlu0 %284
      %288 = vset.pattern.permute.xlu0 0
      %289 = vperm.xlu0 %288, %v281
      %v290 = vpop.permute.xlu0 %289
      %v292 = vmul.f32 %v274, %v285
      %v293 = vmul.f32 %v277, %v290
      %v294 = vld [vmem:[%s7] sm:$0x1]
      %v296 = vlaneseq
      %v297 = vshrl.u32 %v296, 7
      %v298 = vsub.s32 0, %v297
      %v299 = vrot.slane %v294, %v298
      %v301 = vadd.f32 %v292, %v299
      %v302 = vadd.f32 %v293, %v299
      %v303 = vmax.f32 %v301, 0.0
      %v304 = vmax.f32 %v302, 0.0
      %v305 = vld [vmem:[%s8] sm:$0x1]
      %v307 = vlaneseq
      %v308 = vshrl.u32 %v307, 7
      %v309 = vsub.s32 0, %v308
      %v310 = vrot.slane %v305, %v309
      %v312 = vmul.f32 %v303, %v310
      %v313 = vmul.f32 %v304, %v310
      %v314 = vld [vmem:[%s9] sm:$0x1]
      %v316 = vlaneseq
      %v317 = vshrl.u32 %v316, 7
      %v318 = vsub.s32 0, %v317
      %v319 = vrot.slane %v314, %v318
      %v321 = vadd.f32 %v312, %v319
      %v322 = vadd.f32 %v313, %v319
      %v323 = vld [vmem:[%s10] sm:$0xff]
      %v324 = vld [vmem:[%s10 + $0x8] sm:$0xff]
      %v326 = vsel %vm235, %v321, 0
      %v329 = vsel %vm235, %v322, 0
      %331 = vmatprep.subr.mxu0 0.0
      %332 = vmatpush1.msra.mxu0 0.0
      %333 = vmatprep.subr.mxu0 0.0
      %334 = vmatpush1.msra.mxu0 0.0
      %335 = vmatprep.subr.mxu0 0.0
      %336 = vmatpush1.msra.mxu0 0.0
      %337 = vmatprep.subr.mxu0 0.0
      %338 = vmatpush1.msra.mxu0 0.0
      %339 = vmatprep.subr.mxu0 0.0
      %340 = vmatpush1.msra.mxu0 0.0
      %341 = vmatprep.subr.mxu0 0.0
      %342 = vmatpush1.msra.mxu0 0.0
      %343 = vmatprep.subr.mxu0 0.0
      %344 = vmatpush1.msra.mxu0 0.0
      %345 = vmatprep.subr.mxu0 0.0
      %346 = vmatpush1.msra.mxu0 0.0
      %347 = vmatprep.subr.mxu0 0.0
      %348 = vmatpush1.msra.mxu0 0.0
      %349 = vmatprep.subr.mxu0 0.0
      %350 = vmatpush1.msra.mxu0 0.0
      %351 = vmatprep.subr.mxu0 0.0
      %352 = vmatpush1.msra.mxu0 0.0
      %353 = vmatprep.subr.mxu0 0.0
      %354 = vmatpush1.msra.mxu0 0.0
      %355 = vmatprep.subr.mxu0 0.0
      %356 = vmatpush1.msra.mxu0 0.0
      %357 = vmatprep.subr.mxu0 0.0
      %358 = vmatpush1.msra.mxu0 0.0
      %359 = vmatprep.subr.mxu0 0.0
      %360 = vmatpush1.msra.mxu0 %v324
      %361 = vmatprep.subr.mxu0 0.0
      %362 = vmatpush1.msra.mxu0 %v323
      %363 = vmatprep.subr.mxu0 0.0
      %364 = vmatpush2.msra.mxu0 0.0
      %365 = vmatprep.subr.mxu0 0.0
      %366 = vmatpush2.msra.mxu0 0.0
      %367 = vmatprep.subr.mxu0 0.0
      %368 = vmatpush2.msra.mxu0 0.0
      %369 = vmatprep.subr.mxu0 0.0
      %370 = vmatpush2.msra.mxu0 0.0
      %371 = vmatprep.subr.mxu0 0.0
      %372 = vmatpush2.msra.mxu0 0.0
      %373 = vmatprep.subr.mxu0 0.0
      %374 = vmatpush2.msra.mxu0 0.0
      %375 = vmatprep.subr.mxu0 0.0
      %376 = vmatpush2.msra.mxu0 0.0
      %377 = vmatprep.subr.mxu0 0.0
      %378 = vmatpush2.msra.mxu0 0.0
      %379 = vmatprep.subr.mxu0 0.0
      %380 = vmatpush2.msra.mxu0 0.0
      %381 = vmatprep.subr.mxu0 0.0
      %382 = vmatpush2.msra.mxu0 0.0
      %383 = vmatprep.subr.mxu0 0.0
      %384 = vmatpush2.msra.mxu0 0.0
      %385 = vmatprep.subr.mxu0 0.0
      %386 = vmatpush2.msra.mxu0 0.0
      %387 = vmatprep.subr.mxu0 0.0
      %388 = vmatpush2.msra.mxu0 0.0
      %389 = vmatprep.subr.mxu0 0.0
      %390 = vmatpush2.msra.mxu0 0.0
      %391 = vmatprep.subr.mxu0 0.0
      %392 = vmatpush2.msra.mxu0 0.0
      %393 = vmatprep.subr.mxu0 0.0
      %394 = vmatpush2.msra.mxu0 0.0
      %395 = vmatprep.mubr.f32.mxu0 0.0
      %396 = vmatmul.mubr.f32.gmra.mxu0 %v326
      %v397 = vpop.f32.mrf.mxu0
      %v398 = vadd.f32 0.0, %v397
      %v399 = vpop.f32.mrf.mxu0
      %400 = vmatprep.mubr.f32.mxu0 0.0
      %401 = vmatmul.mubr.f32.gmra.mxu0 %v329
      %v402 = vpop.f32.mrf.mxu0
      %v403 = vadd.f32 0.0, %v402
      %v404 = vpop.f32.mrf.mxu0
      %405 = vdwg.mxu0
      %v406 = vmul.f32 %v398, %v220
      %v407 = vmul.f32 %v403, %v225
      %v408 = vpack.c.bf16 %v407, %v406
      %409 = vmatprep.subr.bf16.mxu0 0
      %410 = vmatpush1.bf16.msra.mxu0 0
      %411 = vmatprep.subr.bf16.mxu0 0
      %412 = vmatpush1.bf16.msra.mxu0 0
      %413 = vmatprep.subr.bf16.mxu0 0
      %414 = vmatpush1.bf16.msra.mxu0 0
      %415 = vmatprep.subr.bf16.mxu0 0
      %416 = vmatpush1.bf16.msra.mxu0 0
      %417 = vmatprep.subr.bf16.mxu0 0
      %418 = vmatpush1.bf16.msra.mxu0 0
      %419 = vmatprep.subr.bf16.mxu0 0
      %420 = vmatpush1.bf16.msra.mxu0 0
      %421 = vmatprep.subr.bf16.mxu0 0
      %422 = vmatpush1.bf16.msra.mxu0 0
      %423 = vmatprep.subr.bf16.mxu0 0
      %424 = vmatpush1.bf16.msra.mxu0 %v408
      %425 = vmatprep.subr.bf16.mxu0 0
      %426 = vmatpush2.bf16.msra.mxu0 0
      %427 = vmatprep.subr.bf16.mxu0 0
      %428 = vmatpush2.bf16.msra.mxu0 0
      %429 = vmatprep.subr.bf16.mxu0 0
      %430 = vmatpush2.bf16.msra.mxu0 0
      %431 = vmatprep.subr.bf16.mxu0 0
      %432 = vmatpush2.bf16.msra.mxu0 0
      %433 = vmatprep.subr.bf16.mxu0 0
      %434 = vmatpush2.bf16.msra.mxu0 0
      %435 = vmatprep.subr.bf16.mxu0 0
      %436 = vmatpush2.bf16.msra.mxu0 0
      %437 = vmatprep.subr.bf16.mxu0 0
      %438 = vmatpush2.bf16.msra.mxu0 0
      %439 = vmatprep.subr.bf16.mxu0 0
      %440 = vmatpush2.bf16.msra.mxu0 0
      %441 = vmatprep.mubr.bf16.mxu0 0
      %442 = vmatmul.mubr.bf16.gmra.mxu0 %v237
      %v443 = vpop.f32.mrf.mxu0
      %v444 = vadd.f32 0.0, %v443
      %v445 = vpop.f32.mrf.mxu0
      %v446 = vpop.f32.mrf.mxu0
      %v447 = vadd.f32 0.0, %v446
      %v448 = vpop.f32.mrf.mxu0
      %449 = vdwg.mxu0
      %v450 = vmul.f32 %v444, %v285
      %v451 = vmul.f32 %v447, %v290
      %v452 = vld [vmem:[%s11] sm:$0x1]
      %v454 = vlaneseq
      %v455 = vshrl.u32 %v454, 7
      %v456 = vsub.s32 0, %v455
      %v457 = vrot.slane %v452, %v456
      %v459 = vadd.f32 %v450, %v457
      %v460 = vadd.f32 %v451, %v457
      %vm461 = vcmask 523264
      %462 = vst.msk [vmem:[#allocation4] sm:$0xff] %vm461, %v459
      %463 = vst.msk [vmem:[#allocation4 + $0x8] sm:$0xff] %vm461, %v460
    $region81: #{tpu_custom_call.1} parent=1 // pred_fallthru
      _
    %s464 = smul.u32 0, 32
    %v465 = vld [vmem:[%s12] sm:$0xff]
    %v466 = vld [vmem:[%s12 + $0x8] sm:$0xff]
    %v467 = vld [vmem:[%s12 + $0x10] sm:$0xff]
    %v468 = vld [vmem:[%s12 + $0x18] sm:$0xff]
    %v469 = vld [vmem:[%s13] sm:$0xf]
    %v470 = vld [vmem:[%s14] sm:$0x1]
    %v472 = vlaneseq
    %v473 = vshrl.u32 %v472, 7
    %v474 = vsub.s32 0, %v473
    %v475 = vrot.slane %v470, %v474
    %vm477 = vcmask 31744
    %v479 = vsel %vm477, %v465, 0
    %v482 = vsel %vm477, %v466, 0
    %v485 = vsel %vm477, %v467, 0
    %v488 = vsel %vm477, %v468, 0
    %vm490 = vcmask 1043456
    %v492 = vsel %vm490, %v469, 0
    %494 = vmatprep.subr.mxu0 0.0
    %495 = vmatpush1.msra.mxu0 0.0
    %496 = vmatprep.subr.mxu0 0.0
    %497 = vmatpush1.msra.mxu0 0.0
    %498 = vmatprep.subr.mxu0 0.0
    %499 = vmatpush1.msra.mxu0 0.0
    %500 = vmatprep.subr.mxu0 0.0
    %501 = vmatpush1.msra.mxu0 0.0
    %502 = vmatprep.subr.mxu0 0.0
    %503 = vmatpush1.msra.mxu0 0.0
    %504 = vmatprep.subr.mxu0 0.0
    %505 = vmatpush1.msra.mxu0 0.0
    %506 = vmatprep.subr.mxu0 0.0
    %507 = vmatpush1.msra.mxu0 0.0
    %508 = vmatprep.subr.mxu0 0.0
    %509 = vmatpush1.msra.mxu0 0.0
    %510 = vmatprep.subr.mxu0 0.0
    %511 = vmatpush1.msra.mxu0 0.0
    %512 = vmatprep.subr.mxu0 0.0
    %513 = vmatpush1.msra.mxu0 0.0
    %514 = vmatprep.subr.mxu0 0.0
    %515 = vmatpush1.msra.mxu0 0.0
    %516 = vmatprep.subr.mxu0 0.0
    %517 = vmatpush1.msra.mxu0 0.0
    %518 = vmatprep.subr.mxu0 0.0
    %519 = vmatpush1.msra.mxu0 0.0
    %520 = vmatprep.subr.mxu0 0.0
    %521 = vmatpush1.msra.mxu0 0.0
    %522 = vmatprep.subr.mxu0 0.0
    %523 = vmatpush1.msra.mxu0 0.0
    %524 = vmatprep.subr.mxu0 0.0
    %525 = vmatpush1.msra.mxu0 %v492
    %526 = vmatprep.subr.mxu0 0.0
    %527 = vmatpush2.msra.mxu0 0.0
    %528 = vmatprep.subr.mxu0 0.0
    %529 = vmatpush2.msra.mxu0 0.0
    %530 = vmatprep.subr.mxu0 0.0
    %531 = vmatpush2.msra.mxu0 0.0
    %532 = vmatprep.subr.mxu0 0.0
    %533 = vmatpush2.msra.mxu0 0.0
    %534 = vmatprep.subr.mxu0 0.0
    %535 = vmatpush2.msra.mxu0 0.0
    %536 = vmatprep.subr.mxu0 0.0
    %537 = vmatpush2.msra.mxu0 0.0
    %538 = vmatprep.subr.mxu0 0.0
    %539 = vmatpush2.msra.mxu0 0.0
    %540 = vmatprep.subr.mxu0 0.0
    %541 = vmatpush2.msra.mxu0 0.0
    %542 = vmatprep.subr.mxu0 0.0
    %543 = vmatpush2.msra.mxu0 0.0
    %544 = vmatprep.subr.mxu0 0.0
    %545 = vmatpush2.msra.mxu0 0.0
    %546 = vmatprep.subr.mxu0 0.0
    %547 = vmatpush2.msra.mxu0 0.0
    %548 = vmatprep.subr.mxu0 0.0
    %549 = vmatpush2.msra.mxu0 0.0
    %550 = vmatprep.subr.mxu0 0.0
    %551 = vmatpush2.msra.mxu0 0.0
    %552 = vmatprep.subr.mxu0 0.0
    %553 = vmatpush2.msra.mxu0 0.0
    %554 = vmatprep.subr.mxu0 0.0
    %555 = vmatpush2.msra.mxu0 0.0
    %556 = vmatprep.subr.mxu0 0.0
    %557 = vmatpush2.msra.mxu0 0.0
    %558 = vmatprep.mubr.f32.mxu0 0.0
    %559 = vmatmul.mubr.f32.gmra.mxu0 %v479
    %v560 = vpop.f32.mrf.mxu0
    %v561 = vadd.f32 %v475, %v560
    %v562 = vpop.f32.mrf.mxu0
    %563 = vmatprep.mubr.f32.mxu0 0.0
    %564 = vmatmul.mubr.f32.gmra.mxu0 %v482
    %v565 = vpop.f32.mrf.mxu0
    %v566 = vadd.f32 %v475, %v565
    %v567 = vpop.f32.mrf.mxu0
    %568 = vmatprep.mubr.f32.mxu0 0.0
    %569 = vmatmul.mubr.f32.gmra.mxu0 %v485
    %v570 = vpop.f32.mrf.mxu0
    %v571 = vadd.f32 %v475, %v570
    %v572 = vpop.f32.mrf.mxu0
    %573 = vmatprep.mubr.f32.mxu0 0.0
    %574 = vmatmul.mubr.f32.gmra.mxu0 %v488
    %v575 = vpop.f32.mrf.mxu0
    %v576 = vadd.f32 %v475, %v575
    %v577 = vpop.f32.mrf.mxu0
    %578 = vdwg.mxu0
    %v579 = vmax.f32 %v561, 0.0
    %v580 = vmax.f32 %v566, 0.0
    %v581 = vmax.f32 %v571, 0.0
    %v582 = vmax.f32 %v576, 0.0
    loop: start=0, step=1, limit=32
    $region116: #{tpu_custom_call.1} parent=1 // loop_pre_header
      _
    $region117: #{tpu_custom_call.1} parent=1 // loop_header
      %s584 = sphi 0, %s588
      %p585 = scmp.ge.s32.totalorder %s584, 32
    $region118: #{tpu_custom_call.1} parent=1 // loop_header_branch
      %587 = sbr.rel (%p585) target = $region122
    $region119: #{tpu_custom_call.1} parent=1 // loop_body
      %s589 = sadd.s32 %s464, %s584
      %s590 = sld [smem:[#allocation8 + %s589]]
      %p591 = scmp.gt.s32.totalorder %s590, 0
      %s592 = scalar_select %p591, %s590, 0
      %p593 = scmp.lt.s32.totalorder %s592, 15
      %s594 = scalar_select %p593, %s592, 15
      %s595 = sld [smem:[#allocation9 + %s589]]
      %p596 = scmp.gt.s32.totalorder %s595, 0
      %s597 = scalar_select %p596, %s595, 0
      %p598 = scmp.lt.s32.totalorder %s597, 15
      %s599 = scalar_select %p598, %s597, 15
      %s600 = scalar_lea.vmem [#allocation4], %s594
      %v601 = vld [vmem:[%s600] sm:$0x1]
      %s602 = scalar_lea.vmem [#allocation5], %s584
      %vm603 = vcmask 516096
      %604 = vst.msk [vmem:[%s602] sm:$0x1] %vm603, %v601
      %s605 = scalar_lea.vmem [#allocation4], %s599
      %v606 = vld [vmem:[%s605] sm:$0x1]
      %s607 = scalar_lea.vmem [#allocation6], %s584
      %608 = vst.msk [vmem:[%s607] sm:$0x1] %vm603, %v606
    $region120: #{tpu_custom_call.1} parent=1 // loop_footer
      %s588 = sadd.s32 1, %s584
    $region121: #{tpu_custom_call.1} parent=1 // loop_footer_branch
      %583 = sbr.rel target = $region117
    $region122: #{tpu_custom_call.1} parent=1 // loop_exit
      _
    %v609 = vld [vmem:[#allocation5] sm:$0xff]
    %v610 = vld [vmem:[#allocation5 + $0x8] sm:$0xff]
    %v611 = vld [vmem:[#allocation5 + $0x10] sm:$0xff]
    %v612 = vld [vmem:[#allocation5 + $0x18] sm:$0xff]
    %v613 = vld [vmem:[#allocation6] sm:$0xff]
    %v614 = vld [vmem:[#allocation6 + $0x8] sm:$0xff]
    %v615 = vld [vmem:[#allocation6 + $0x10] sm:$0xff]
    %v616 = vld [vmem:[#allocation6 + $0x18] sm:$0xff]
    %621 = vrot.lane.b32.xlu0 %v613, 64
    %v622 = vpop.permute.xlu0 %621
    %623 = vrot.lane.b32.xlu0 %v614, 64
    %v624 = vpop.permute.xlu0 %623
    %625 = vrot.lane.b32.xlu0 %v615, 64
    %v626 = vpop.permute.xlu0 %625
    %627 = vrot.lane.b32.xlu0 %v616, 64
    %v628 = vpop.permute.xlu0 %627
    %vm633 = vcmask 523264
    %v634 = vsel %vm633, %v609, %v622
    %v635 = vsel %vm633, %v610, %v624
    %v636 = vsel %vm633, %v611, %v626
    %v637 = vsel %vm633, %v612, %v628
    %v638 = vld [vmem:[%s15] sm:$0xff]
    %v639 = vld [vmem:[%s15 + $0x8] sm:$0xff]
    %v640 = vld [vmem:[%s16] sm:$0xff]
    %v641 = vld [vmem:[%s16 + $0x8] sm:$0xff]
    %v642 = vld [vmem:[%s16 + $0x10] sm:$0xff]
    %v643 = vld [vmem:[%s16 + $0x18] sm:$0xff]
    %v644 = vld [vmem:[%s16 + $0x20] sm:$0xff]
    %v645 = vld [vmem:[%s16 + $0x28] sm:$0xff]
    %v646 = vld [vmem:[%s16 + $0x30] sm:$0xff]
    %v647 = vld [vmem:[%s16 + $0x38] sm:$0xff]
    %v648 = vld [vmem:[%s16 + $0x40] sm:$0xff]
    %v649 = vld [vmem:[%s16 + $0x48] sm:$0xff]
    %v650 = vld [vmem:[%s16 + $0x50] sm:$0xff]
    %v651 = vld [vmem:[%s16 + $0x58] sm:$0xff]
    %v652 = vld [vmem:[%s16 + $0x60] sm:$0xff]
    %v653 = vld [vmem:[%s16 + $0x68] sm:$0xff]
    %v654 = vld [vmem:[%s16 + $0x70] sm:$0xff]
    %v655 = vld [vmem:[%s16 + $0x78] sm:$0xff]
    %656 = vmatprep.subr.mxu0 0.0
    %657 = vmatpush1.msra.mxu0 %v655
    %658 = vmatprep.subr.mxu0 0.0
    %659 = vmatpush1.msra.mxu0 %v654
    %660 = vmatprep.subr.mxu0 0.0
    %661 = vmatpush1.msra.mxu0 %v653
    %662 = vmatprep.subr.mxu0 0.0
    %663 = vmatpush1.msra.mxu0 %v652
    %664 = vmatprep.subr.mxu0 0.0
    %665 = vmatpush1.msra.mxu0 %v651
    %666 = vmatprep.subr.mxu0 0.0
    %667 = vmatpush1.msra.mxu0 %v650
    %668 = vmatprep.subr.mxu0 0.0
    %669 = vmatpush1.msra.mxu0 %v649
    %670 = vmatprep.subr.mxu0 0.0
    %671 = vmatpush1.msra.mxu0 %v648
    %672 = vmatprep.subr.mxu0 0.0
    %673 = vmatpush1.msra.mxu0 %v647
    %674 = vmatprep.subr.mxu0 0.0
    %675 = vmatpush1.msra.mxu0 %v646
    %676 = vmatprep.subr.mxu0 0.0
    %677 = vmatpush1.msra.mxu0 %v645
    %678 = vmatprep.subr.mxu0 0.0
    %679 = vmatpush1.msra.mxu0 %v644
    %680 = vmatprep.subr.mxu0 0.0
    %681 = vmatpush1.msra.mxu0 %v643
    %682 = vmatprep.subr.mxu0 0.0
    %683 = vmatpush1.msra.mxu0 %v642
    %684 = vmatprep.subr.mxu0 0.0
    %685 = vmatpush1.msra.mxu0 %v641
    %686 = vmatprep.subr.mxu0 0.0
    %687 = vmatpush1.msra.mxu0 %v640
    %688 = vmatprep.subr.mxu0 0.0
    %689 = vmatpush2.msra.mxu0 0.0
    %690 = vmatprep.subr.mxu0 0.0
    %691 = vmatpush2.msra.mxu0 0.0
    %692 = vmatprep.subr.mxu0 0.0
    %693 = vmatpush2.msra.mxu0 0.0
    %694 = vmatprep.subr.mxu0 0.0
    %695 = vmatpush2.msra.mxu0 0.0
    %696 = vmatprep.subr.mxu0 0.0
    %697 = vmatpush2.msra.mxu0 0.0
    %698 = vmatprep.subr.mxu0 0.0
    %699 = vmatpush2.msra.mxu0 0.0
    %700 = vmatprep.subr.mxu0 0.0
    %701 = vmatpush2.msra.mxu0 0.0
    %702 = vmatprep.subr.mxu0 0.0
    %703 = vmatpush2.msra.mxu0 0.0
    %704 = vmatprep.subr.mxu0 0.0
    %705 = vmatpush2.msra.mxu0 0.0
    %706 = vmatprep.subr.mxu0 0.0
    %707 = vmatpush2.msra.mxu0 0.0
    %708 = vmatprep.subr.mxu0 0.0
    %709 = vmatpush2.msra.mxu0 0.0
    %710 = vmatprep.subr.mxu0 0.0
    %711 = vmatpush2.msra.mxu0 0.0
    %712 = vmatprep.subr.mxu0 0.0
    %713 = vmatpush2.msra.mxu0 0.0
    %714 = vmatprep.subr.mxu0 0.0
    %715 = vmatpush2.msra.mxu0 0.0
    %716 = vmatprep.subr.mxu0 0.0
    %717 = vmatpush2.msra.mxu0 0.0
    %718 = vmatprep.subr.mxu0 0.0
    %719 = vmatpush2.msra.mxu0 0.0
    %720 = vmatprep.mubr.f32.mxu0 0.0
    %721 = vmatmul.mubr.f32.gmra.mxu0 %v634
    %v722 = vpop.f32.mrf.mxu0
    %v723 = vadd.f32 0.0, %v722
    %v724 = vpop.f32.mrf.mxu0
    %725 = vmatprep.mubr.f32.mxu0 0.0
    %726 = vmatmul.mubr.f32.gmra.mxu0 %v635
    %v727 = vpop.f32.mrf.mxu0
    %v728 = vadd.f32 0.0, %v727
    %v729 = vpop.f32.mrf.mxu0
    %730 = vmatprep.mubr.f32.mxu0 0.0
    %731 = vmatmul.mubr.f32.gmra.mxu0 %v636
    %v732 = vpop.f32.mrf.mxu0
    %v733 = vadd.f32 0.0, %v732
    %v734 = vpop.f32.mrf.mxu0
    %735 = vmatprep.mubr.f32.mxu0 0.0
    %736 = vmatmul.mubr.f32.gmra.mxu0 %v637
    %v737 = vpop.f32.mrf.mxu0
    %v738 = vadd.f32 0.0, %v737
    %v739 = vpop.f32.mrf.mxu0
    %740 = vdwg.mxu0
    %vm741 = vcmask 130048
    %v743 = vsel %vm741, %v579, 0
    %v746 = vsel %vm741, %v580, 0
    %v749 = vsel %vm741, %v581, 0
    %v752 = vsel %vm741, %v582, 0
    %754 = vmatprep.subr.mxu0 0.0
    %755 = vmatpush1.msra.mxu0 0.0
    %756 = vmatprep.subr.mxu0 0.0
    %757 = vmatpush1.msra.mxu0 0.0
    %758 = vmatprep.subr.mxu0 0.0
    %759 = vmatpush1.msra.mxu0 0.0
    %760 = vmatprep.subr.mxu0 0.0
    %761 = vmatpush1.msra.mxu0 0.0
    %762 = vmatprep.subr.mxu0 0.0
    %763 = vmatpush1.msra.mxu0 0.0
    %764 = vmatprep.subr.mxu0 0.0
    %765 = vmatpush1.msra.mxu0 0.0
    %766 = vmatprep.subr.mxu0 0.0
    %767 = vmatpush1.msra.mxu0 0.0
    %768 = vmatprep.subr.mxu0 0.0
    %769 = vmatpush1.msra.mxu0 0.0
    %770 = vmatprep.subr.mxu0 0.0
    %771 = vmatpush1.msra.mxu0 0.0
    %772 = vmatprep.subr.mxu0 0.0
    %773 = vmatpush1.msra.mxu0 0.0
    %774 = vmatprep.subr.mxu0 0.0
    %775 = vmatpush1.msra.mxu0 0.0
    %776 = vmatprep.subr.mxu0 0.0
    %777 = vmatpush1.msra.mxu0 0.0
    %778 = vmatprep.subr.mxu0 0.0
    %779 = vmatpush1.msra.mxu0 0.0
    %780 = vmatprep.subr.mxu0 0.0
    %781 = vmatpush1.msra.mxu0 0.0
    %782 = vmatprep.subr.mxu0 0.0
    %783 = vmatpush1.msra.mxu0 %v639
    %784 = vmatprep.subr.mxu0 0.0
    %785 = vmatpush1.msra.mxu0 %v638
    %786 = vmatprep.subr.mxu0 0.0
    %787 = vmatpush2.msra.mxu0 0.0
    %788 = vmatprep.subr.mxu0 0.0
    %789 = vmatpush2.msra.mxu0 0.0
    %790 = vmatprep.subr.mxu0 0.0
    %791 = vmatpush2.msra.mxu0 0.0
    %792 = vmatprep.subr.mxu0 0.0
    %793 = vmatpush2.msra.mxu0 0.0
    %794 = vmatprep.subr.mxu0 0.0
    %795 = vmatpush2.msra.mxu0 0.0
    %796 = vmatprep.subr.mxu0 0.0
    %797 = vmatpush2.msra.mxu0 0.0
    %798 = vmatprep.subr.mxu0 0.0
    %799 = vmatpush2.msra.mxu0 0.0
    %800 = vmatprep.subr.mxu0 0.0
    %801 = vmatpush2.msra.mxu0 0.0
    %802 = vmatprep.subr.mxu0 0.0
    %803 = vmatpush2.msra.mxu0 0.0
    %804 = vmatprep.subr.mxu0 0.0
    %805 = vmatpush2.msra.mxu0 0.0
    %806 = vmatprep.subr.mxu0 0.0
    %807 = vmatpush2.msra.mxu0 0.0
    %808 = vmatprep.subr.mxu0 0.0
    %809 = vmatpush2.msra.mxu0 0.0
    %810 = vmatprep.subr.mxu0 0.0
    %811 = vmatpush2.msra.mxu0 0.0
    %812 = vmatprep.subr.mxu0 0.0
    %813 = vmatpush2.msra.mxu0 0.0
    %814 = vmatprep.subr.mxu0 0.0
    %815 = vmatpush2.msra.mxu0 0.0
    %816 = vmatprep.subr.mxu0 0.0
    %817 = vmatpush2.msra.mxu0 0.0
    %818 = vmatprep.mubr.f32.mxu0 0.0
    %819 = vmatmul.mubr.f32.gmra.mxu0 %v743
    %v820 = vpop.f32.mrf.mxu0
    %v821 = vadd.f32 %v723, %v820
    %v822 = vpop.f32.mrf.mxu0
    %823 = vmatprep.mubr.f32.mxu0 0.0
    %824 = vmatmul.mubr.f32.gmra.mxu0 %v746
    %v825 = vpop.f32.mrf.mxu0
    %v826 = vadd.f32 %v728, %v825
    %v827 = vpop.f32.mrf.mxu0
    %828 = vmatprep.mubr.f32.mxu0 0.0
    %829 = vmatmul.mubr.f32.gmra.mxu0 %v749
    %v830 = vpop.f32.mrf.mxu0
    %v831 = vadd.f32 %v733, %v830
    %v832 = vpop.f32.mrf.mxu0
    %833 = vmatprep.mubr.f32.mxu0 0.0
    %834 = vmatmul.mubr.f32.gmra.mxu0 %v752
    %v835 = vpop.f32.mrf.mxu0
    %v836 = vadd.f32 %v738, %v835
    %v837 = vpop.f32.mrf.mxu0
    %838 = vdwg.mxu0
    %v839 = vld [vmem:[%s17] sm:$0x1]
    %v841 = vlaneseq
    %v842 = vshrl.u32 %v841, 7
    %v843 = vsub.s32 0, %v842
    %v844 = vrot.slane %v839, %v843
    %v846 = vadd.f32 %v821, %v844
    %v847 = vadd.f32 %v826, %v844
    %v848 = vadd.f32 %v831, %v844
    %v849 = vadd.f32 %v836, %v844
    %v850 = vmax.f32 %v846, 0.0
    %v851 = vmax.f32 %v847, 0.0
    %v852 = vmax.f32 %v848, 0.0
    %v853 = vmax.f32 %v849, 0.0
    %v854 = vld [vmem:[%s18] sm:$0x1]
    %v856 = vlaneseq
    %v857 = vshrl.u32 %v856, 7
    %v858 = vsub.s32 0, %v857
    %v859 = vrot.slane %v854, %v858
    %v861 = vmul.f32 %v850, %v859
    %v862 = vmul.f32 %v851, %v859
    %v863 = vmul.f32 %v852, %v859
    %v864 = vmul.f32 %v853, %v859
    %v865 = vld [vmem:[%s19] sm:$0x1]
    %v867 = vlaneseq
    %v868 = vshrl.u32 %v867, 7
    %v869 = vsub.s32 0, %v868
    %v870 = vrot.slane %v865, %v869
    %v872 = vadd.f32 %v861, %v870
    %v873 = vadd.f32 %v862, %v870
    %v874 = vadd.f32 %v863, %v870
    %v875 = vadd.f32 %v864, %v870
    %v876 = vld [vmem:[%s20] sm:$0xff]
    %v877 = vld [vmem:[%s20 + $0x8] sm:$0xff]
    %v878 = vld [vmem:[%s20 + $0x10] sm:$0xff]
    %v879 = vld [vmem:[%s20 + $0x18] sm:$0xff]
    %v880 = vld [vmem:[%s21] sm:$0x1]
    %v882 = vlaneseq
    %v883 = vshrl.u32 %v882, 7
    %v884 = vsub.s32 0, %v883
    %v885 = vrot.slane %v880, %v884
    %vm887 = vcmask 261120
    %v889 = vsel %vm887, %v872, 0
    %v892 = vsel %vm887, %v873, 0
    %v895 = vsel %vm887, %v874, 0
    %v898 = vsel %vm887, %v875, 0
    %900 = vmatprep.subr.mxu0 0.0
    %901 = vmatpush1.msra.mxu0 0.0
    %902 = vmatprep.subr.mxu0 0.0
    %903 = vmatpush1.msra.mxu0 0.0
    %904 = vmatprep.subr.mxu0 0.0
    %905 = vmatpush1.msra.mxu0 0.0
    %906 = vmatprep.subr.mxu0 0.0
    %907 = vmatpush1.msra.mxu0 0.0
    %908 = vmatprep.subr.mxu0 0.0
    %909 = vmatpush1.msra.mxu0 0.0
    %910 = vmatprep.subr.mxu0 0.0
    %911 = vmatpush1.msra.mxu0 0.0
    %912 = vmatprep.subr.mxu0 0.0
    %913 = vmatpush1.msra.mxu0 0.0
    %914 = vmatprep.subr.mxu0 0.0
    %915 = vmatpush1.msra.mxu0 0.0
    %916 = vmatprep.subr.mxu0 0.0
    %917 = vmatpush1.msra.mxu0 0.0
    %918 = vmatprep.subr.mxu0 0.0
    %919 = vmatpush1.msra.mxu0 0.0
    %920 = vmatprep.subr.mxu0 0.0
    %921 = vmatpush1.msra.mxu0 0.0
    %922 = vmatprep.subr.mxu0 0.0
    %923 = vmatpush1.msra.mxu0 0.0
    %924 = vmatprep.subr.mxu0 0.0
    %925 = vmatpush1.msra.mxu0 %v879
    %926 = vmatprep.subr.mxu0 0.0
    %927 = vmatpush1.msra.mxu0 %v878
    %928 = vmatprep.subr.mxu0 0.0
    %929 = vmatpush1.msra.mxu0 %v877
    %930 = vmatprep.subr.mxu0 0.0
    %931 = vmatpush1.msra.mxu0 %v876
    %932 = vmatprep.subr.mxu0 0.0
    %933 = vmatpush2.msra.mxu0 0.0
    %934 = vmatprep.subr.mxu0 0.0
    %935 = vmatpush2.msra.mxu0 0.0
    %936 = vmatprep.subr.mxu0 0.0
    %937 = vmatpush2.msra.mxu0 0.0
    %938 = vmatprep.subr.mxu0 0.0
    %939 = vmatpush2.msra.mxu0 0.0
    %940 = vmatprep.subr.mxu0 0.0
    %941 = vmatpush2.msra.mxu0 0.0
    %942 = vmatprep.subr.mxu0 0.0
    %943 = vmatpush2.msra.mxu0 0.0
    %944 = vmatprep.subr.mxu0 0.0
    %945 = vmatpush2.msra.mxu0 0.0
    %946 = vmatprep.subr.mxu0 0.0
    %947 = vmatpush2.msra.mxu0 0.0
    %948 = vmatprep.subr.mxu0 0.0
    %949 = vmatpush2.msra.mxu0 0.0
    %950 = vmatprep.subr.mxu0 0.0
    %951 = vmatpush2.msra.mxu0 0.0
    %952 = vmatprep.subr.mxu0 0.0
    %953 = vmatpush2.msra.mxu0 0.0
    %954 = vmatprep.subr.mxu0 0.0
    %955 = vmatpush2.msra.mxu0 0.0
    %956 = vmatprep.subr.mxu0 0.0
    %957 = vmatpush2.msra.mxu0 0.0
    %958 = vmatprep.subr.mxu0 0.0
    %959 = vmatpush2.msra.mxu0 0.0
    %960 = vmatprep.subr.mxu0 0.0
    %961 = vmatpush2.msra.mxu0 0.0
    %962 = vmatprep.subr.mxu0 0.0
    %963 = vmatpush2.msra.mxu0 0.0
    %964 = vmatprep.mubr.f32.mxu0 0.0
    %965 = vmatmul.mubr.f32.gmra.mxu0 %v889
    %v966 = vpop.f32.mrf.mxu0
    %v967 = vadd.f32 %v885, %v966
    %v968 = vpop.f32.mrf.mxu0
    %969 = vmatprep.mubr.f32.mxu0 0.0
    %970 = vmatmul.mubr.f32.gmra.mxu0 %v892
    %v971 = vpop.f32.mrf.mxu0
    %v972 = vadd.f32 %v885, %v971
    %v973 = vpop.f32.mrf.mxu0
    %974 = vmatprep.mubr.f32.mxu0 0.0
    %975 = vmatmul.mubr.f32.gmra.mxu0 %v895
    %v976 = vpop.f32.mrf.mxu0
    %v977 = vadd.f32 %v885, %v976
    %v978 = vpop.f32.mrf.mxu0
    %979 = vmatprep.mubr.f32.mxu0 0.0
    %980 = vmatmul.mubr.f32.gmra.mxu0 %v898
    %v981 = vpop.f32.mrf.mxu0
    %v982 = vadd.f32 %v885, %v981
    %v983 = vpop.f32.mrf.mxu0
    %984 = vdwg.mxu0
    %v985 = vmax.f32 %v967, 0.0
    %v986 = vmax.f32 %v972, 0.0
    %v987 = vmax.f32 %v977, 0.0
    %v988 = vmax.f32 %v982, 0.0
    %v989 = vlaneseq
    %v990 = vand.u32 %v989, 127
    %vm991 = vcmp.lt.s32.totalorder %v990, 5
    %v992 = vsel %vm991, %v985, -1e+30
    %v993 = vsel %vm991, %v986, -1e+30
    %v994 = vsel %vm991, %v987, -1e+30
    %v995 = vsel %vm991, %v988, -1e+30
    %996 = vmax.xlane.f32.xlu0 %v992
    %v997 = vpop.xlane.xlu0 %996
    %998 = vmax.xlane.f32.xlu0 %v993
    %v999 = vpop.xlane.xlu0 %998
    %1000 = vmax.xlane.f32.xlu0 %v994
    %v1001 = vpop.xlane.xlu0 %1000
    %1002 = vmax.xlane.f32.xlu0 %v995
    %v1003 = vpop.xlane.xlu0 %1002
    %v1004 = vsub.f32 %v985, %v997
    %v1005 = vsub.f32 %v986, %v999
    %v1006 = vsub.f32 %v987, %v1001
    %v1007 = vsub.f32 %v988, %v1003
    %v1008 = vmul.f32 %v1004, 1.442695
    %v1009 = vpow.pop %v1008
    %v1010 = vmul.f32 %v1005, 1.442695
    %v1011 = vpow.pop %v1010
    %v1012 = vmul.f32 %v1006, 1.442695
    %v1013 = vpow.pop %v1012
    %v1014 = vmul.f32 %v1007, 1.442695
    %v1015 = vpow.pop %v1014
    %v1016 = vsel %vm991, %v1009, 0.0
    %v1017 = vsel %vm991, %v1011, 0.0
    %v1018 = vsel %vm991, %v1013, 0.0
    %v1019 = vsel %vm991, %v1015, 0.0
    %1020 = vadd.xlane.f32.xlu0 %v1016
    %v1021 = vpop.xlane.xlu0 %1020
    %1022 = vadd.xlane.f32.xlu0 %v1017
    %v1023 = vpop.xlane.xlu0 %1022
    %1024 = vadd.xlane.f32.xlu0 %v1018
    %v1025 = vpop.xlane.xlu0 %1024
    %1026 = vadd.xlane.f32.xlu0 %v1019
    %v1027 = vpop.xlane.xlu0 %1026
    %v1028 = vlog2.pop %v1021
    %v1029 = vmul.f32 %v1028, 0.6931472
    %v1030 = vlog2.pop %v1023
    %v1031 = vmul.f32 %v1030, 0.6931472
    %v1032 = vlog2.pop %v1025
    %v1033 = vmul.f32 %v1032, 0.6931472
    %v1034 = vlog2.pop %v1027
    %v1035 = vmul.f32 %v1034, 0.6931472
    %v1036 = vadd.f32 %v997, %v1029
    %v1037 = vadd.f32 %v999, %v1031
    %v1038 = vadd.f32 %v1001, %v1033
    %v1039 = vadd.f32 %v1003, %v1035
    %v1040 = vsub.f32 %v985, %v1036
    %v1041 = vsub.f32 %v986, %v1037
    %v1042 = vsub.f32 %v987, %v1038
    %v1043 = vsub.f32 %v988, %v1039
    %1044 = vst [vmem:[#allocation10] sm:$0xff] %v1040
    %1045 = vst [vmem:[#allocation10 + $0x8] sm:$0xff] %v1041
    %1046 = vst [vmem:[#allocation10 + $0x10] sm:$0xff] %v1042
    %1047 = vst [vmem:[#allocation10 + $0x18] sm:$0xff] %v1043
    // Predicated region
    $region123: #{tpu_custom_call.1} parent=1 // pred_check
      _
    $region124: #{tpu_custom_call.1} parent=1 // pred_check_branch
      %1049 = sbr.rel (0) target = $region126
    $region125: #{tpu_custom_call.1} parent=1 // pred_region
      %s1051 = ssub.s32 512, 512
      %1052 = vsyncadd [#allocation11], %s1051
      %s1053 = sshll.u32 [#allocation10], 4
      %s1054 = int_to_ptr.vmem [resolvable:$true] %s1053
      %1059 = dma.vmem_to_hbm [thread:$0]  %s1054, 512, %s22, [#allocation11], 128, 128, 8
    $region126: #{tpu_custom_call.1} parent=1 // pred_fallthru
      _
    // Predicated region
    $region127: #{tpu_custom_call.1} parent=1 // pred_check
      _
    $region128: #{tpu_custom_call.1} parent=1 // pred_check_branch
      %1061 = sbr.rel (0) target = $region130
    $region129: #{tpu_custom_call.1} parent=1 // pred_region
      %1062 = dma.done [#allocation11], 512
    $region130: #{tpu_custom_call.1} parent=1 // pred_fallthru
      _
    %1063 = vsyncpa [#allocation11], 1
  %1064 = vsyncmov [#allocation3]
  %s1065 = vpop.sfrf %1064
  %p1066 = scmp.eq.s32.totalorder %s1065, 0
  %p1067 = pneg %p1066
  %1069 = shalt.err (%p1067)

</llo_original>
